<compile_context>
chip_gen: v7x
topology: tpu7x:2x2x1
jax: 0.10.0
libtpu: 0.0.40
codegen_flags: <defaults>
</compile_context>

<pallas_src>
import math
from functools import partial

import numpy as np
import jax
import jax.numpy as jnp
from jax.experimental import pallas as pl
from jax.experimental.pallas import tpu as pltpu

# ----------------------------- config (small, consistent with the module) --------------------
B = 2          # batch
S = 8          # sequence length
E = 32         # embed_dim
H = 8          # num_heads
DH = E // H    # head_dim = 4
M = 64         # mlp_dim (scaled down from 768 for the demo)
MP = 128       # lane-padded mlp width (unmasked, lane-dense stores)
EPS = 1e-5     # nn.LayerNorm default eps
NEG_INF = -1e9


# ----------------------------------- fused kernel --------------------------------------------
def _transformer_block_kernel(xq_ref, xk_ref, xv_ref, wq_ref, wk_ref, wv_ref, wo_ref,
                              w1_ref, pp_ref, rep_ref, hm_ref, sel_ref, *rest,
                              E, M, has_mask):
    if has_mask:
        mask_ref, out_ref = rest
    else:
        (out_ref,) = rest
    f32 = jnp.float32

    pv = pp_ref[...]                                     # [16, 128] packed params (one DMA)
    bq, bk, bv, bo = pv[0:1, :E], pv[1:2, :E], pv[2:3, :E], pv[3:4, :E]
    g1, be1 = pv[4:5, :E], pv[5:6, :E]
    b1, g2, be2 = pv[6:7, :], pv[7:8, :], pv[8:9, :]     # zero-padded past M

    # ---- QKV projections (dense weights, no zero-padded block-diagonal) ---------------------
    q = jnp.dot(xq_ref[...], wq_ref[...], preferred_element_type=f32) + bq    # [S, E]
    k = jnp.dot(xk_ref[...], wk_ref[...], preferred_element_type=f32) + bk
    v = jnp.dot(xv_ref[...], wv_ref[...], preferred_element_type=f32) + bv

    # ---- all heads at once: rep replicates q rows over heads AND carries 1/sqrt(DH);
    #      hm zeroes non-owned head features so one matmul yields every head's scores. ---------
    hm = hm_ref[...]                                                           # [H*S, E]
    qexp = jnp.dot(rep_ref[...], q, preferred_element_type=f32) * hm           # [H*S, E]

    # scores transposed: keys on sublanes, (head, query) rows on lanes -> dense softmax tile
    s_t = jax.lax.dot_general(k, qexp, (((1,), (1,)), ((), ())),
                              preferred_element_type=f32)                      # [S, H*S]
    if has_mask:
        s_t = s_t + mask_ref[...]
    s_max = jnp.max(s_t, axis=0, keepdims=True)                                # [1, H*S]
    p_t = jnp.exp(s_t - s_max)
    p_t = p_t / jnp.sum(p_t, axis=0, keepdims=True)      # exact divide (no approx reciprocal)

    # ctx_all[r, e] = sum_j p_t[j, r] * v[j, e]; keep head-owned features; sum heads == concat
    ctx_all = jax.lax.dot_general(p_t, v, (((0,), (0,)), ((), ())),
                                  preferred_element_type=f32) * hm             # [H*S, E]
    ctx = jnp.dot(sel_ref[...], ctx_all, preferred_element_type=f32)           # [S, E]

    # ---- output projection -> dropout (identity in eval) -> LayerNorm(E) --------------------
    # TODO(synk): training-mode dropout (p=0.3) would use pltpu.prng_seed / stateful_bernoulli.
    x = jnp.dot(ctx, wo_ref[...], preferred_element_type=f32) + bo
    mu1 = jnp.mean(x, axis=-1, keepdims=True)
    d1 = x - mu1
    var1 = jnp.mean(d1 * d1, axis=-1, keepdims=True)
    x = d1 * jax.lax.rsqrt(var1 + EPS) * g1 + be1

    # ---- MLP Linear(E -> M, lane-padded to MP) + LayerNorm over the real M columns ----------
    # padded columns of w1/b1 are exact zeros -> sum(y)/M and sum(y*y)/M are exact M-column
    # statistics; g2/be2 padding zeroes the padded output lanes (wrapper slices them off).
    y = jnp.dot(x, w1_ref[...], preferred_element_type=f32) + b1               # [S, MP]
    mu2 = jnp.sum(y, axis=-1, keepdims=True) * (1.0 / M)
    var2 = jnp.sum(y * y, axis=-1, keepdims=True) * (1.0 / M) - mu2 * mu2
    out_ref[...] = ((y - mu2) * jax.lax.rsqrt(var2 + EPS) * g2 + be2).astype(out_ref.dtype)


# ------------------------- one-time host-side packing (hoisted out of calls) -----------------
def make_constants(s=S, e=E, h=H):
    """Data-independent attention constants, built once on host (no per-launch iota chains)."""
    dh = e // h
    hs = h * s
    r = np.arange(hs)
    # rep[h*s+i, j] = 1/sqrt(dh) if j == i  (q-row replication over heads + folded score scale)
    rep = (r[:, None] % s == np.arange(s)[None, :]).astype(np.float32) / math.sqrt(dh)
    # hm[h*s+i, f]  = 1 if feature f belongs to head h
    hm = ((r[:, None] // s) == (np.arange(e)[None, :] // dh)).astype(np.float32)
    # sel[i, h*s+i'] = 1 if i' == i  (sums per-head contexts -> head concatenation)
    sel = (np.arange(s)[:, None] == (r[None, :] % s)).astype(np.float32)
    return jnp.asarray(rep), jnp.asarray(hm), jnp.asarray(sel)


def prepare_params(p):
    """One-time parameter packing: padded W1 and a single [16,128] block of small params."""
    e, m = p["w1"].shape
    w1p = jnp.zeros((e, MP), jnp.float32).at[:, :m].set(p["w1"])
    pp = jnp.zeros((16, 128), jnp.float32)
    for name, row in (("bq", 0), ("bk", 1), ("bv", 2), ("bo", 3), ("ln1_g", 4), ("ln1_b", 5),
                      ("b1", 6), ("ln2_g", 7), ("ln2_b", 8)):
        vec = p[name].reshape(-1).astype(jnp.float32)
        pp = pp.at[row, :vec.shape[0]].set(vec)
    return {"wq": p["wq"], "wk": p["wk"], "wv": p["wv"], "wo": p["wo"], "w1p": w1p, "pp": pp}


# --------------------------------------- jitted wrapper --------------------------------------
@jax.jit
def transformer_block(packed, consts, Q, K, V, mask=None):
    """Q, K, V: [B, S, E] f32. mask: optional additive [B, S, S]. Returns [B, S, M]."""
    b, s, e = Q.shape
    assert e % H == 0 and e <= 128 and M <= MP
    hs = H * s
    rep, hm, sel = consts
    qf = Q.reshape(b * s, e).astype(jnp.float32)
    kf = K.reshape(b * s, e).astype(jnp.float32)
    vf = V.reshape(b * s, e).astype(jnp.float32)

    bcast = lambda rr, cc: pl.BlockSpec((rr, cc), lambda i: (0, 0))   # grid-invariant blocks
    perb = lambda rr, cc: pl.BlockSpec((rr, cc), lambda i: (i, 0))    # one block per batch

    args = [qf, kf, vf, packed["wq"], packed["wk"], packed["wv"], packed["wo"],
            packed["w1p"], packed["pp"], rep, hm, sel]
    in_specs = [perb(s, e), perb(s, e), perb(s, e),
                bcast(e, e), bcast(e, e), bcast(e, e), bcast(e, e),
                bcast(e, MP), bcast(16, 128),
                bcast(hs, s), bcast(hs, e), bcast(s, hs)]

    has_mask = mask is not None
    if has_mask:
        # mexp[b, j, h*s+i] = mask[b, i, j]  (matches the transposed [S_kv, H*S] score tile)
        mexp = jnp.tile(jnp.swapaxes(mask.astype(jnp.float32), 1, 2), (1, 1, H))
        args.append(mexp.reshape(b * s, hs))
        in_specs.append(perb(s, hs))

    out = pl.pallas_call(
        partial(_transformer_block_kernel, E=e, M=M, has_mask=has_mask),
        out_shape=jax.ShapeDtypeStruct((b * s, MP), jnp.float32),
        grid=(b,),
        in_specs=in_specs,
        out_specs=perb(s, MP),
        compiler_params=pltpu.CompilerParams(dimension_semantics=("parallel",)),
    )(*args)
    return out[:, :M].reshape(b, s, M)


# --------------------------------------- reference -------------------------------------------
def make_params(key):
    ks = jax.random.split(key, 12)
    w = lambda k, shp: (0.02 * jax.random.normal(k, shp)).astype(jnp.float32)
    bias = lambda k, shp: (0.1 * jax.random.normal(k, shp)).astype(jnp.float32)
    return {
        # attention / mlp weights stored [in, out] (already transposed vs PyTorch nn.Linear)
        "wq": w(ks[0], (E, E)), "bq": bias(ks[1], (1, E)),
        "wk": w(ks[2], (E, E)), "bk": bias(ks[3], (1, E)),
        "wv": w(ks[4], (E, E)), "bv": bias(ks[5], (1, E)),
        "wo": w(ks[6], (E, E)), "bo": bias(ks[7], (1, E)),
        "ln1_g": 1.0 + bias(ks[8], (1, E)), "ln1_b": bias(ks[9], (1, E)),
        "w1": w(ks[10], (E, M)), "b1": bias(ks[11], (1, M)),
        "ln2_g": jnp.full((1, M), 1.1, jnp.float32), "ln2_b": jnp.full((1, M), 0.05, jnp.float32),
    }


def reference(Q, K, V, p, mask=None):
    """Pure-JAX reference (eval-mode dropout).  Matmuls run at HIGHEST precision so the check is
    not polluted by XLA's default single-pass bf16 MXU lowering of f32 dots."""
    hp = jax.lax.Precision.HIGHEST
    dot = lambda a, b: jnp.dot(a, b, precision=hp)
    q = dot(Q, p["wq"]) + p["bq"]
    k = dot(K, p["wk"]) + p["bk"]
    v = dot(V, p["wv"]) + p["bv"]
    bsz, s, _ = Q.shape
    qh = q.reshape(bsz, s, H, DH).transpose(0, 2, 1, 3)
    kh = k.reshape(bsz, s, H, DH).transpose(0, 2, 1, 3)
    vh = v.reshape(bsz, s, H, DH).transpose(0, 2, 1, 3)
    scores = jnp.einsum("bhqd,bhkd->bhqk", qh, kh, precision=hp) / math.sqrt(DH)
    if mask is not None:
        scores = scores + mask[:, None, :, :]
    attn = jax.nn.softmax(scores, axis=-1)
    ctx = jnp.einsum("bhqk,bhkd->bhqd", attn, vh, precision=hp)
    ctx = ctx.transpose(0, 2, 1, 3).reshape(bsz, s, E)
    x = dot(ctx, p["wo"]) + p["bo"]

    def ln(z, g, be):
        mu = z.mean(-1, keepdims=True)
        var = ((z - mu) ** 2).mean(-1, keepdims=True)
        return (z - mu) * jax.lax.rsqrt(var + EPS) * g + be

    x = ln(x, p["ln1_g"], p["ln1_b"])          # dropout is identity in eval
    y = dot(x, p["w1"]) + p["b1"]
    return ln(y, p["ln2_g"], p["ln2_b"])


if __name__ == "__main__":
    key = jax.random.PRNGKey(0)
    kq, kk, kv, kp = jax.random.split(key, 4)
    Q = jax.random.normal(kq, (B, S, E), dtype=jnp.float32)
    K = jax.random.normal(kk, (B, S, E), dtype=jnp.float32)
    V = jax.random.normal(kv, (B, S, E), dtype=jnp.float32)
    params = make_params(kp)

    packed = prepare_params(params)        # one-time packing, hoisted out of the call path
    consts = make_constants()              # one-time data-independent attention constants

    # kernel (accurate f32 / interpret) vs HIGHEST-precision reference agree to ~1e-6; margin
    # covers a possible reduced-precision MXU pass for f32 operands on real hardware.
    tol = dict(atol=2e-2, rtol=2e-2)

    # variant 1: no mask (mask input is skipped entirely at trace time)
    out = jax.block_until_ready(transformer_block(packed, consts, Q, K, V, None))
    ref = reference(Q, K, V, params, mask=None)
    assert out.shape == (B, S, M)
    assert jnp.allclose(out, ref, **tol), "mismatch vs reference (no mask)"

    # variant 2: additive causal mask
    causal = jnp.where(jnp.tril(jnp.ones((S, S), dtype=bool)), 0.0, NEG_INF).astype(jnp.float32)
    mask = jnp.broadcast_to(causal, (B, S, S))
    out_m = jax.block_until_ready(transformer_block(packed, consts, Q, K, V, mask))
    ref_m = reference(Q, K, V, params, mask=mask)
    assert jnp.allclose(out_m, ref_m, **tol), "mismatch vs reference (masked)"

    print("KERNEL_OK")
</pallas_src>

<mosaic_0001>
module attributes {stable_mosaic.version = 11 : i64} {
  func.func @_transformer_block_kernel(%arg0: i32, %arg1: memref<8x32xf32, #tpu.memory_space<vmem>>, %arg2: memref<8x32xf32, #tpu.memory_space<vmem>>, %arg3: memref<8x32xf32, #tpu.memory_space<vmem>>, %arg4: memref<32x32xf32, #tpu.memory_space<vmem>>, %arg5: memref<32x32xf32, #tpu.memory_space<vmem>>, %arg6: memref<32x32xf32, #tpu.memory_space<vmem>>, %arg7: memref<32x32xf32, #tpu.memory_space<vmem>>, %arg8: memref<32x128xf32, #tpu.memory_space<vmem>>, %arg9: memref<16x128xf32, #tpu.memory_space<vmem>>, %arg10: memref<64x8xf32, #tpu.memory_space<vmem>>, %arg11: memref<64x32xf32, #tpu.memory_space<vmem>>, %arg12: memref<8x64xf32, #tpu.memory_space<vmem>>, %arg13: memref<8x128xf32, #tpu.memory_space<vmem>>) attributes {dimension_semantics = [#tpu.dimension_semantics<parallel>], iteration_bounds = array<i64: 2>, scalar_prefetch = 0 : i64, scratch_operands = 0 : i64, tpu.core_type = #tpu.core_type<tc>, window_params = [{transform_indices = @transform_0, window_bounds = array<i64: 8, 32>}, {transform_indices = @transform_1, window_bounds = array<i64: 8, 32>}, {transform_indices = @transform_2, window_bounds = array<i64: 8, 32>}, {pipeline_mode = #tpu.pipeline_mode<synchronous>, transform_indices = @transform_3, window_bounds = array<i64: 32, 32>}, {pipeline_mode = #tpu.pipeline_mode<synchronous>, transform_indices = @transform_4, window_bounds = array<i64: 32, 32>}, {pipeline_mode = #tpu.pipeline_mode<synchronous>, transform_indices = @transform_5, window_bounds = array<i64: 32, 32>}, {pipeline_mode = #tpu.pipeline_mode<synchronous>, transform_indices = @transform_6, window_bounds = array<i64: 32, 32>}, {pipeline_mode = #tpu.pipeline_mode<synchronous>, transform_indices = @transform_7, window_bounds = array<i64: 32, 128>}, {pipeline_mode = #tpu.pipeline_mode<synchronous>, transform_indices = @transform_8, window_bounds = array<i64: 16, 128>}, {pipeline_mode = #tpu.pipeline_mode<synchronous>, transform_indices = @transform_9, window_bounds = array<i64: 64, 8>}, {pipeline_mode = #tpu.pipeline_mode<synchronous>, transform_indices = @transform_10, window_bounds = array<i64: 64, 32>}, {pipeline_mode = #tpu.pipeline_mode<synchronous>, transform_indices = @transform_11, window_bounds = array<i64: 8, 64>}, {transform_indices = @transform_12, window_bounds = array<i64: 8, 128>}]} {
    %c0 = arith.constant 0 : index
    %c0_0 = arith.constant 0 : index
    %0 = vector.load %arg9[%c0, %c0_0] : memref<16x128xf32, #tpu.memory_space<vmem>>, vector<16x128xf32>
    %1 = vector.extract_strided_slice %0 {offsets = [0, 0], sizes = [1, 32], strides = [1, 1]} : vector<16x128xf32> to vector<1x32xf32>
    %2 = vector.extract_strided_slice %0 {offsets = [1, 0], sizes = [1, 32], strides = [1, 1]} : vector<16x128xf32> to vector<1x32xf32>
    %3 = vector.extract_strided_slice %0 {offsets = [2, 0], sizes = [1, 32], strides = [1, 1]} : vector<16x128xf32> to vector<1x32xf32>
    %4 = vector.extract_strided_slice %0 {offsets = [3, 0], sizes = [1, 32], strides = [1, 1]} : vector<16x128xf32> to vector<1x32xf32>
    %5 = vector.extract_strided_slice %0 {offsets = [4, 0], sizes = [1, 32], strides = [1, 1]} : vector<16x128xf32> to vector<1x32xf32>
    %6 = vector.extract_strided_slice %0 {offsets = [5, 0], sizes = [1, 32], strides = [1, 1]} : vector<16x128xf32> to vector<1x32xf32>
    %7 = vector.extract_strided_slice %0 {offsets = [6, 0], sizes = [1, 128], strides = [1, 1]} : vector<16x128xf32> to vector<1x128xf32>
    %8 = vector.extract_strided_slice %0 {offsets = [7, 0], sizes = [1, 128], strides = [1, 1]} : vector<16x128xf32> to vector<1x128xf32>
    %9 = vector.extract_strided_slice %0 {offsets = [8, 0], sizes = [1, 128], strides = [1, 1]} : vector<16x128xf32> to vector<1x128xf32>
    %c0_1 = arith.constant 0 : index
    %c0_2 = arith.constant 0 : index
    %10 = vector.load %arg1[%c0_1, %c0_2] : memref<8x32xf32, #tpu.memory_space<vmem>>, vector<8x32xf32>
    %c0_3 = arith.constant 0 : index
    %c0_4 = arith.constant 0 : index
    %11 = vector.load %arg4[%c0_3, %c0_4] : memref<32x32xf32, #tpu.memory_space<vmem>>, vector<32x32xf32>
    %cst = arith.constant dense<0.000000e+00> : vector<8x32xf32>
    %12 = tpu.matmul %10, %11, %cst {dimension_numbers = #tpu.dot_dimension_numbers<[1], [0], [0], [1], [0, 0, 1, 1], [], []>} : vector<8x32xf32>, vector<32x32xf32>, vector<8x32xf32> -> vector<8x32xf32>
    %13 = vector.broadcast %1 : vector<1x32xf32> to vector<8x32xf32>
    %14 = arith.addf %12, %13 : vector<8x32xf32>
    %c0_5 = arith.constant 0 : index
    %c0_6 = arith.constant 0 : index
    %15 = vector.load %arg2[%c0_5, %c0_6] : memref<8x32xf32, #tpu.memory_space<vmem>>, vector<8x32xf32>
    %c0_7 = arith.constant 0 : index
    %c0_8 = arith.constant 0 : index
    %16 = vector.load %arg5[%c0_7, %c0_8] : memref<32x32xf32, #tpu.memory_space<vmem>>, vector<32x32xf32>
    %cst_9 = arith.constant dense<0.000000e+00> : vector<8x32xf32>
    %17 = tpu.matmul %15, %16, %cst_9 {dimension_numbers = #tpu.dot_dimension_numbers<[1], [0], [0], [1], [0, 0, 1, 1], [], []>} : vector<8x32xf32>, vector<32x32xf32>, vector<8x32xf32> -> vector<8x32xf32>
    %18 = vector.broadcast %2 : vector<1x32xf32> to vector<8x32xf32>
    %19 = arith.addf %17, %18 : vector<8x32xf32>
    %c0_10 = arith.constant 0 : index
    %c0_11 = arith.constant 0 : index
    %20 = vector.load %arg3[%c0_10, %c0_11] : memref<8x32xf32, #tpu.memory_space<vmem>>, vector<8x32xf32>
    %c0_12 = arith.constant 0 : index
    %c0_13 = arith.constant 0 : index
    %21 = vector.load %arg6[%c0_12, %c0_13] : memref<32x32xf32, #tpu.memory_space<vmem>>, vector<32x32xf32>
    %cst_14 = arith.constant dense<0.000000e+00> : vector<8x32xf32>
    %22 = tpu.matmul %20, %21, %cst_14 {dimension_numbers = #tpu.dot_dimension_numbers<[1], [0], [0], [1], [0, 0, 1, 1], [], []>} : vector<8x32xf32>, vector<32x32xf32>, vector<8x32xf32> -> vector<8x32xf32>
    %23 = vector.broadcast %3 : vector<1x32xf32> to vector<8x32xf32>
    %24 = arith.addf %22, %23 : vector<8x32xf32>
    %c0_15 = arith.constant 0 : index
    %c0_16 = arith.constant 0 : index
    %25 = vector.load %arg11[%c0_15, %c0_16] : memref<64x32xf32, #tpu.memory_space<vmem>>, vector<64x32xf32>
    %c0_17 = arith.constant 0 : index
    %c0_18 = arith.constant 0 : index
    %26 = vector.load %arg10[%c0_17, %c0_18] : memref<64x8xf32, #tpu.memory_space<vmem>>, vector<64x8xf32>
    %cst_19 = arith.constant dense<0.000000e+00> : vector<64x32xf32>
    %27 = tpu.matmul %26, %14, %cst_19 {dimension_numbers = #tpu.dot_dimension_numbers<[1], [0], [0], [1], [0, 0, 1, 1], [], []>} : vector<64x8xf32>, vector<8x32xf32>, vector<64x32xf32> -> vector<64x32xf32>
    %28 = arith.mulf %27, %25 : vector<64x32xf32>
    %cst_20 = arith.constant dense<0.000000e+00> : vector<8x64xf32>
    %29 = tpu.matmul %19, %28, %cst_20 {dimension_numbers = #tpu.dot_dimension_numbers<[1], [1], [0], [0], [0, 0, 1, 0], [], []>} : vector<8x32xf32>, vector<64x32xf32>, vector<8x64xf32> -> vector<8x64xf32>
    %cst_21 = arith.constant dense<0xFF800000> : vector<64xf32>
    %30 = vector.multi_reduction <maximumf>, %29, %cst_21 [0] : vector<8x64xf32> to vector<64xf32>
    %31 = vector.shape_cast %30 : vector<64xf32> to vector<1x64xf32>
    %32 = vector.broadcast %31 : vector<1x64xf32> to vector<8x64xf32>
    %33 = arith.subf %29, %32 : vector<8x64xf32>
    %34 = math.exp %33 : vector<8x64xf32>
    %cst_22 = arith.constant dense<0.000000e+00> : vector<64xf32>
    %35 = vector.multi_reduction <add>, %34, %cst_22 [0] : vector<8x64xf32> to vector<64xf32>
    %36 = vector.shape_cast %35 : vector<64xf32> to vector<1x64xf32>
    %37 = vector.broadcast %36 : vector<1x64xf32> to vector<8x64xf32>
    %38 = arith.divf %34, %37 : vector<8x64xf32>
    %cst_23 = arith.constant dense<0.000000e+00> : vector<64x32xf32>
    %39 = tpu.matmul %38, %24, %cst_23 {dimension_numbers = #tpu.dot_dimension_numbers<[0], [0], [1], [1], [0, 1, 1, 1], [], []>} : vector<8x64xf32>, vector<8x32xf32>, vector<64x32xf32> -> vector<64x32xf32>
    %40 = arith.mulf %39, %25 : vector<64x32xf32>
    %c0_24 = arith.constant 0 : index
    %c0_25 = arith.constant 0 : index
    %41 = vector.load %arg12[%c0_24, %c0_25] : memref<8x64xf32, #tpu.memory_space<vmem>>, vector<8x64xf32>
    %cst_26 = arith.constant dense<0.000000e+00> : vector<8x32xf32>
    %42 = tpu.matmul %41, %40, %cst_26 {dimension_numbers = #tpu.dot_dimension_numbers<[1], [0], [0], [1], [0, 0, 1, 1], [], []>} : vector<8x64xf32>, vector<64x32xf32>, vector<8x32xf32> -> vector<8x32xf32>
    %c0_27 = arith.constant 0 : index
    %c0_28 = arith.constant 0 : index
    %43 = vector.load %arg7[%c0_27, %c0_28] : memref<32x32xf32, #tpu.memory_space<vmem>>, vector<32x32xf32>
    %cst_29 = arith.constant dense<0.000000e+00> : vector<8x32xf32>
    %44 = tpu.matmul %42, %43, %cst_29 {dimension_numbers = #tpu.dot_dimension_numbers<[1], [0], [0], [1], [0, 0, 1, 1], [], []>} : vector<8x32xf32>, vector<32x32xf32>, vector<8x32xf32> -> vector<8x32xf32>
    %45 = vector.broadcast %4 : vector<1x32xf32> to vector<8x32xf32>
    %46 = arith.addf %44, %45 : vector<8x32xf32>
    %cst_30 = arith.constant dense<0.000000e+00> : vector<8xf32>
    %47 = vector.multi_reduction <add>, %46, %cst_30 [1] : vector<8x32xf32> to vector<8xf32>
    %48 = vector.shape_cast %47 : vector<8xf32> to vector<8x1xf32>
    %cst_31 = arith.constant 3.200000e+01 : f32
    %49 = vector.broadcast %cst_31 : f32 to vector<8x1xf32>
    %50 = arith.divf %48, %49 : vector<8x1xf32>
    %51 = vector.broadcast %50 : vector<8x1xf32> to vector<8x32xf32>
    %52 = arith.subf %46, %51 : vector<8x32xf32>
    %53 = arith.mulf %52, %52 : vector<8x32xf32>
    %cst_32 = arith.constant dense<0.000000e+00> : vector<8xf32>
    %54 = vector.multi_reduction <add>, %53, %cst_32 [1] : vector<8x32xf32> to vector<8xf32>
    %55 = vector.shape_cast %54 : vector<8xf32> to vector<8x1xf32>
    %cst_33 = arith.constant 3.200000e+01 : f32
    %56 = vector.broadcast %cst_33 : f32 to vector<8x1xf32>
    %57 = arith.divf %55, %56 : vector<8x1xf32>
    %cst_34 = arith.constant 9.99999974E-6 : f32
    %58 = vector.broadcast %cst_34 : f32 to vector<8x1xf32>
    %59 = arith.addf %57, %58 : vector<8x1xf32>
    %60 = math.rsqrt %59 : vector<8x1xf32>
    %61 = vector.broadcast %60 : vector<8x1xf32> to vector<8x32xf32>
    %62 = arith.mulf %52, %61 : vector<8x32xf32>
    %63 = vector.broadcast %5 : vector<1x32xf32> to vector<8x32xf32>
    %64 = arith.mulf %62, %63 : vector<8x32xf32>
    %65 = vector.broadcast %6 : vector<1x32xf32> to vector<8x32xf32>
    %66 = arith.addf %64, %65 : vector<8x32xf32>
    %c0_35 = arith.constant 0 : index
    %c0_36 = arith.constant 0 : index
    %67 = vector.load %arg8[%c0_35, %c0_36] : memref<32x128xf32, #tpu.memory_space<vmem>>, vector<32x128xf32>
    %cst_37 = arith.constant dense<0.000000e+00> : vector<8x128xf32>
    %68 = tpu.matmul %66, %67, %cst_37 {dimension_numbers = #tpu.dot_dimension_numbers<[1], [0], [0], [1], [0, 0, 1, 1], [], []>} : vector<8x32xf32>, vector<32x128xf32>, vector<8x128xf32> -> vector<8x128xf32>
    %69 = vector.broadcast %7 : vector<1x128xf32> to vector<8x128xf32>
    %70 = arith.addf %68, %69 : vector<8x128xf32>
    %cst_38 = arith.constant dense<0.000000e+00> : vector<8xf32>
    %71 = vector.multi_reduction <add>, %70, %cst_38 [1] : vector<8x128xf32> to vector<8xf32>
    %72 = vector.shape_cast %71 : vector<8xf32> to vector<8x1xf32>
    %cst_39 = arith.constant 1.562500e-02 : f32
    %73 = vector.broadcast %cst_39 : f32 to vector<8x1xf32>
    %74 = arith.mulf %72, %73 : vector<8x1xf32>
    %75 = arith.mulf %70, %70 : vector<8x128xf32>
    %cst_40 = arith.constant dense<0.000000e+00> : vector<8xf32>
    %76 = vector.multi_reduction <add>, %75, %cst_40 [1] : vector<8x128xf32> to vector<8xf32>
    %77 = vector.shape_cast %76 : vector<8xf32> to vector<8x1xf32>
    %cst_41 = arith.constant 1.562500e-02 : f32
    %78 = vector.broadcast %cst_41 : f32 to vector<8x1xf32>
    %79 = arith.mulf %77, %78 : vector<8x1xf32>
    %80 = arith.mulf %74, %74 : vector<8x1xf32>
    %81 = arith.subf %79, %80 : vector<8x1xf32>
    %82 = vector.broadcast %74 : vector<8x1xf32> to vector<8x128xf32>
    %83 = arith.subf %70, %82 : vector<8x128xf32>
    %cst_42 = arith.constant 9.99999974E-6 : f32
    %84 = vector.broadcast %cst_42 : f32 to vector<8x1xf32>
    %85 = arith.addf %81, %84 : vector<8x1xf32>
    %86 = math.rsqrt %85 : vector<8x1xf32>
    %87 = vector.broadcast %86 : vector<8x1xf32> to vector<8x128xf32>
    %88 = arith.mulf %83, %87 : vector<8x128xf32>
    %89 = vector.broadcast %8 : vector<1x128xf32> to vector<8x128xf32>
    %90 = arith.mulf %88, %89 : vector<8x128xf32>
    %91 = vector.broadcast %9 : vector<1x128xf32> to vector<8x128xf32>
    %92 = arith.addf %90, %91 : vector<8x128xf32>
    %c0_43 = arith.constant 0 : index
    %c0_44 = arith.constant 0 : index
    %93 = vector.load %arg13[%c0_43, %c0_44] : memref<8x128xf32, #tpu.memory_space<vmem>>, vector<8x128xf32>
    tpu.vector_store %arg13[%c0_43, %c0_44], %92 {strides = array<i32>} : memref<8x128xf32, #tpu.memory_space<vmem>>, vector<8x128xf32>,
    return
  }
  func.func @transform_0(%arg0: i32) -> (i32, i32) {
    %c0_i32 = arith.constant 0 : i32
    %c0_i32_0 = arith.constant 0 : i32
    return %arg0, %c0_i32 : i32, i32
  }
  func.func @transform_1(%arg0: i32) -> (i32, i32) {
    %c0_i32 = arith.constant 0 : i32
    %c0_i32_0 = arith.constant 0 : i32
    return %arg0, %c0_i32 : i32, i32
  }
  func.func @transform_2(%arg0: i32) -> (i32, i32) {
    %c0_i32 = arith.constant 0 : i32
    %c0_i32_0 = arith.constant 0 : i32
    return %arg0, %c0_i32 : i32, i32
  }
  func.func @transform_3(%arg0: i32) -> (i32, i32) {
    %c0_i32 = arith.constant 0 : i32
    %c0_i32_0 = arith.constant 0 : i32
    %c0_i32_1 = arith.constant 0 : i32
    return %c0_i32, %c0_i32_0 : i32, i32
  }
  func.func @transform_4(%arg0: i32) -> (i32, i32) {
    %c0_i32 = arith.constant 0 : i32
    %c0_i32_0 = arith.constant 0 : i32
    %c0_i32_1 = arith.constant 0 : i32
    return %c0_i32, %c0_i32_0 : i32, i32
  }
  func.func @transform_5(%arg0: i32) -> (i32, i32) {
    %c0_i32 = arith.constant 0 : i32
    %c0_i32_0 = arith.constant 0 : i32
    %c0_i32_1 = arith.constant 0 : i32
    return %c0_i32, %c0_i32_0 : i32, i32
  }
  func.func @transform_6(%arg0: i32) -> (i32, i32) {
    %c0_i32 = arith.constant 0 : i32
    %c0_i32_0 = arith.constant 0 : i32
    %c0_i32_1 = arith.constant 0 : i32
    return %c0_i32, %c0_i32_0 : i32, i32
  }
  func.func @transform_7(%arg0: i32) -> (i32, i32) {
    %c0_i32 = arith.constant 0 : i32
    %c0_i32_0 = arith.constant 0 : i32
    %c0_i32_1 = arith.constant 0 : i32
    return %c0_i32, %c0_i32_0 : i32, i32
  }
  func.func @transform_8(%arg0: i32) -> (i32, i32) {
    %c0_i32 = arith.constant 0 : i32
    %c0_i32_0 = arith.constant 0 : i32
    %c0_i32_1 = arith.constant 0 : i32
    return %c0_i32, %c0_i32_0 : i32, i32
  }
  func.func @transform_9(%arg0: i32) -> (i32, i32) {
    %c0_i32 = arith.constant 0 : i32
    %c0_i32_0 = arith.constant 0 : i32
    %c0_i32_1 = arith.constant 0 : i32
    return %c0_i32, %c0_i32_0 : i32, i32
  }
  func.func @transform_10(%arg0: i32) -> (i32, i32) {
    %c0_i32 = arith.constant 0 : i32
    %c0_i32_0 = arith.constant 0 : i32
    %c0_i32_1 = arith.constant 0 : i32
    return %c0_i32, %c0_i32_0 : i32, i32
  }
  func.func @transform_11(%arg0: i32) -> (i32, i32) {
    %c0_i32 = arith.constant 0 : i32
    %c0_i32_0 = arith.constant 0 : i32
    %c0_i32_1 = arith.constant 0 : i32
    return %c0_i32, %c0_i32_0 : i32, i32
  }
  func.func @transform_12(%arg0: i32) -> (i32, i32) {
    %c0_i32 = arith.constant 0 : i32
    %c0_i32_0 = arith.constant 0 : i32
    return %arg0, %c0_i32 : i32, i32
  }
}

</mosaic_0001>

<llo_original>
// kernel: transformer_block.1
$region0: #{transformer_block.1}
  #allocation0 [shape = 'u32[]', space=smem, size = 0x4, offset = 0x4, fixed_abs, tag = 'smem constant byte address 0x4 - core index']
  #allocation1 [shape = 'u32[144,128]{1,0:T(1,128)}', space=vmem, size = 0x12000, scoped, tag = 'internal scratch']
  %s0 = inlined_call_operand.vmem [shape: f32[16,32], index: 0, kind: input, shape index: {}]
  %s1 = inlined_call_operand.vmem [shape: f32[16,32], index: 1, kind: input, shape index: {}]
  %s2 = inlined_call_operand.vmem [shape: f32[16,32], index: 2, kind: input, shape index: {}]
  %s3 = inlined_call_operand.vmem [shape: f32[32,32], index: 3, kind: input, shape index: {}]
  %s4 = inlined_call_operand.vmem [shape: f32[32,32], index: 4, kind: input, shape index: {}]
  %s5 = inlined_call_operand.vmem [shape: f32[32,32], index: 5, kind: input, shape index: {}]
  %s6 = inlined_call_operand.vmem [shape: f32[32,32], index: 6, kind: input, shape index: {}]
  %s7 = inlined_call_operand.hbm [shape: f32[32,128], index: 7, kind: input, shape index: {}]
  %s8 = inlined_call_operand.hbm [shape: f32[16,128], index: 8, kind: input, shape index: {}]
  %s9 = inlined_call_operand.vmem [shape: f32[64,8], index: 9, kind: input, shape index: {}]
  %s10 = inlined_call_operand.vmem [shape: f32[64,32], index: 10, kind: input, shape index: {}]
  %s11 = inlined_call_operand.hbm [shape: f32[8,64], index: 11, kind: input, shape index: {}]
  %s12 = inlined_call_operand.vmem [shape: f32[16,128], index: 12, kind: output, shape index: {}]
  %s13 = sld [smem:[#allocation0]]
  $region93: #{transformer_block.1} parent=0
    _
  %s15 = ssub.s32 1, %s13
  %s16 = scalar_select 0, %s15, %s13
  $region1: #{transformer_block.1} parent=0
    #allocation2 [shape = 'u8[16384]{0}', space=vmem, size = 0x4000, scoped, tag = 'input window, operand 7, single buffered']
    #allocation3 [shape = 's32[2]{0}', space=sflag, size = 0x8, scoped, tag = 'scoped memory for transformer_block.1']
    #allocation4 [shape = 'u8[8192]{0}', space=vmem, size = 0x2000, scoped, tag = 'input window, operand 8, single buffered']
    #allocation5 [shape = 's32[1]{0}', space=sflag, size = 0x4, scoped, tag = 'scoped memory for transformer_block.1']
    #allocation6 [shape = 'u8[4096]{0}', space=vmem, size = 0x1000, scoped, tag = 'input window, operand 11, single buffered']
    %17 = vsyncpa [#allocation3], 0
    %18 = vsyncpa [#allocation5], 0
    loop: start=0, step=1, limit=4
    $region2: #{transformer_block.1} parent=1 // loop_pre_header
      _
    $region3: #{transformer_block.1} parent=1 // loop_header
      %s20 = sphi 0, %s24
      %p21 = scmp.ge.s32.totalorder %s20, 4
      %s30 = sphi 0, %s32
      %s33 = sphi 0, %s30
      %s34 = sphi 0, %s33
      %s50 = sphi 0, %s34
      %s56 = sphi 0, %s58
      %s59 = sphi 0, %s56
      %s60 = sphi 0, %s59
      %s76 = sphi 0, %s60
      %s82 = sphi 0, %s84
      %s85 = sphi 0, %s82
      %s86 = sphi 0, %s85
      %s102 = sphi 0, %s86
      %s106 = sphi 0, %s106
      %s108 = sphi 0, %s106
      %s109 = sphi 0, %s108
      %s123 = sphi 0, %s109
      %s127 = sphi 0, %s127
      %s129 = sphi 0, %s127
      %s130 = sphi 0, %s129
      %s144 = sphi 0, %s130
      %s148 = sphi 0, %s148
      %s150 = sphi 0, %s148
      %s151 = sphi 0, %s150
      %s165 = sphi 0, %s151
      %s169 = sphi 0, %s169
      %s171 = sphi 0, %s169
      %s172 = sphi 0, %s171
      %s186 = sphi 0, %s172
      %s190 = sphi 0, %s190
      %s192 = sphi 0, %s190
      %s193 = sphi 0, %s192
      %s207 = sphi 0, %s193
      %s211 = sphi 0, %s211
      %s213 = sphi 0, %s211
      %s214 = sphi 0, %s213
      %s228 = sphi 0, %s214
      %s232 = sphi 0, %s232
      %s234 = sphi 0, %s232
      %s235 = sphi 0, %s234
      %s249 = sphi 0, %s235
      %s253 = sphi 0, %s253
      %s255 = sphi 0, %s253
      %s256 = sphi 0, %s255
      %s270 = sphi 0, %s256
      %s274 = sphi 0, %s274
      %s276 = sphi 0, %s274
      %s277 = sphi 0, %s276
      %s291 = sphi 0, %s277
      %s297 = sphi 0, %s299
      %s300 = sphi 0, %s297
      %s301 = sphi 0, %s300
      %s317 = sphi 0, %s301
    $region4: #{transformer_block.1} parent=1 // loop_header_branch
      %23 = sbr.rel (%p21) target = $region8
    $region5: #{transformer_block.1} parent=1 // loop_body
      %s25 = ssub.s32 %s20, 1
      %s26 = ssub.s32 %s20, 2
      %s27 = sadd.s32 %s20, 1
      %s28 = ssub.s32 %s20, %s27
      %p29 = scmp.eq.s32.totalorder %s28, 0
      %s31 = sadd.s32 %s30, 1
      %s32 = scalar_select %p29, %s30, %s31
      %p35 = pneg %p29
      %p36 = scmp.eq.s32.totalorder %s20, 1
      %p37 = por %p35, %p36
      %p38 = scmp.ne.s32.totalorder %s30, %s33
      %p39 = scmp.eq.s32.totalorder %s20, 0
      %p40 = por %p38, %p39
      %p41 = scmp.ne.s32.totalorder %s30, %s33
      %p42 = scmp.eq.s32.totalorder %s25, 1
      %p43 = por %p41, %p42
      %p44 = scmp.ne.s32.totalorder %s33, %s34
      %p45 = scmp.eq.s32.totalorder %s25, 0
      %p46 = por %p44, %p45
      %p47 = scmp.ne.s32.totalorder %s33, %s34
      %p48 = scmp.eq.s32.totalorder %s26, 1
      %p49 = por %p47, %p48
      %p51 = scmp.ne.s32.totalorder %s34, %s50
      %p52 = scmp.eq.s32.totalorder %s26, 0
      %p53 = por %p51, %p52
      %s54 = ssub.s32 %s20, %s27
      %p55 = scmp.eq.s32.totalorder %s54, 0
      %s57 = sadd.s32 %s56, 1
      %s58 = scalar_select %p55, %s56, %s57
      %p61 = pneg %p55
      %p62 = scmp.eq.s32.totalorder %s20, 1
      %p63 = por %p61, %p62
      %p64 = scmp.ne.s32.totalorder %s56, %s59
      %p65 = scmp.eq.s32.totalorder %s20, 0
      %p66 = por %p64, %p65
      %p67 = scmp.ne.s32.totalorder %s56, %s59
      %p68 = scmp.eq.s32.totalorder %s25, 1
      %p69 = por %p67, %p68
      %p70 = scmp.ne.s32.totalorder %s59, %s60
      %p71 = scmp.eq.s32.totalorder %s25, 0
      %p72 = por %p70, %p71
      %p73 = scmp.ne.s32.totalorder %s59, %s60
      %p74 = scmp.eq.s32.totalorder %s26, 1
      %p75 = por %p73, %p74
      %p77 = scmp.ne.s32.totalorder %s60, %s76
      %p78 = scmp.eq.s32.totalorder %s26, 0
      %p79 = por %p77, %p78
      %s80 = ssub.s32 %s20, %s27
      %p81 = scmp.eq.s32.totalorder %s80, 0
      %s83 = sadd.s32 %s82, 1
      %s84 = scalar_select %p81, %s82, %s83
      %p87 = pneg %p81
      %p88 = scmp.eq.s32.totalorder %s20, 1
      %p89 = por %p87, %p88
      %p90 = scmp.ne.s32.totalorder %s82, %s85
      %p91 = scmp.eq.s32.totalorder %s20, 0
      %p92 = por %p90, %p91
      %p93 = scmp.ne.s32.totalorder %s82, %s85
      %p94 = scmp.eq.s32.totalorder %s25, 1
      %p95 = por %p93, %p94
      %p96 = scmp.ne.s32.totalorder %s85, %s86
      %p97 = scmp.eq.s32.totalorder %s25, 0
      %p98 = por %p96, %p97
      %p99 = scmp.ne.s32.totalorder %s85, %s86
      %p100 = scmp.eq.s32.totalorder %s26, 1
      %p101 = por %p99, %p100
      %p103 = scmp.ne.s32.totalorder %s86, %s102
      %p104 = scmp.eq.s32.totalorder %s26, 0
      %p105 = por %p103, %p104
      %s107 = sadd.s32 %s106, 1
      %p110 = scmp.eq.s32.totalorder %s20, 1
      %p111 = scmp.ne.s32.totalorder %s106, %s108
      %p112 = scmp.eq.s32.totalorder %s20, 0
      %p113 = por %p111, %p112
      %p114 = scmp.ne.s32.totalorder %s106, %s108
      %p115 = scmp.eq.s32.totalorder %s25, 1
      %p116 = por %p114, %p115
      %p117 = scmp.ne.s32.totalorder %s108, %s109
      %p118 = scmp.eq.s32.totalorder %s25, 0
      %p119 = por %p117, %p118
      %p120 = scmp.ne.s32.totalorder %s108, %s109
      %p121 = scmp.eq.s32.totalorder %s26, 1
      %p122 = por %p120, %p121
      %p124 = scmp.ne.s32.totalorder %s109, %s123
      %p125 = scmp.eq.s32.totalorder %s26, 0
      %p126 = por %p124, %p125
      %s128 = sadd.s32 %s127, 1
      %p131 = scmp.eq.s32.totalorder %s20, 1
      %p132 = scmp.ne.s32.totalorder %s127, %s129
      %p133 = scmp.eq.s32.totalorder %s20, 0
      %p134 = por %p132, %p133
      %p135 = scmp.ne.s32.totalorder %s127, %s129
      %p136 = scmp.eq.s32.totalorder %s25, 1
      %p137 = por %p135, %p136
      %p138 = scmp.ne.s32.totalorder %s129, %s130
      %p139 = scmp.eq.s32.totalorder %s25, 0
      %p140 = por %p138, %p139
      %p141 = scmp.ne.s32.totalorder %s129, %s130
      %p142 = scmp.eq.s32.totalorder %s26, 1
      %p143 = por %p141, %p142
      %p145 = scmp.ne.s32.totalorder %s130, %s144
      %p146 = scmp.eq.s32.totalorder %s26, 0
      %p147 = por %p145, %p146
      %s149 = sadd.s32 %s148, 1
      %p152 = scmp.eq.s32.totalorder %s20, 1
      %p153 = scmp.ne.s32.totalorder %s148, %s150
      %p154 = scmp.eq.s32.totalorder %s20, 0
      %p155 = por %p153, %p154
      %p156 = scmp.ne.s32.totalorder %s148, %s150
      %p157 = scmp.eq.s32.totalorder %s25, 1
      %p158 = por %p156, %p157
      %p159 = scmp.ne.s32.totalorder %s150, %s151
      %p160 = scmp.eq.s32.totalorder %s25, 0
      %p161 = por %p159, %p160
      %p162 = scmp.ne.s32.totalorder %s150, %s151
      %p163 = scmp.eq.s32.totalorder %s26, 1
      %p164 = por %p162, %p163
      %p166 = scmp.ne.s32.totalorder %s151, %s165
      %p167 = scmp.eq.s32.totalorder %s26, 0
      %p168 = por %p166, %p167
      %s170 = sadd.s32 %s169, 1
      %p173 = scmp.eq.s32.totalorder %s20, 1
      %p174 = scmp.ne.s32.totalorder %s169, %s171
      %p175 = scmp.eq.s32.totalorder %s20, 0
      %p176 = por %p174, %p175
      %p177 = scmp.ne.s32.totalorder %s169, %s171
      %p178 = scmp.eq.s32.totalorder %s25, 1
      %p179 = por %p177, %p178
      %p180 = scmp.ne.s32.totalorder %s171, %s172
      %p181 = scmp.eq.s32.totalorder %s25, 0
      %p182 = por %p180, %p181
      %p183 = scmp.ne.s32.totalorder %s171, %s172
      %p184 = scmp.eq.s32.totalorder %s26, 1
      %p185 = por %p183, %p184
      %p187 = scmp.ne.s32.totalorder %s172, %s186
      %p188 = scmp.eq.s32.totalorder %s26, 0
      %p189 = por %p187, %p188
      %s191 = sadd.s32 %s190, 1
      %p194 = scmp.eq.s32.totalorder %s20, 1
      %p195 = scmp.ne.s32.totalorder %s190, %s192
      %p196 = scmp.eq.s32.totalorder %s20, 0
      %p197 = por %p195, %p196
      %p198 = scmp.ne.s32.totalorder %s190, %s192
      %p199 = scmp.eq.s32.totalorder %s25, 1
      %p200 = por %p198, %p199
      %p201 = scmp.ne.s32.totalorder %s192, %s193
      %p202 = scmp.eq.s32.totalorder %s25, 0
      %p203 = por %p201, %p202
      %p204 = scmp.ne.s32.totalorder %s192, %s193
      %p205 = scmp.eq.s32.totalorder %s26, 1
      %p206 = por %p204, %p205
      %p208 = scmp.ne.s32.totalorder %s193, %s207
      %p209 = scmp.eq.s32.totalorder %s26, 0
      %p210 = por %p208, %p209
      %s212 = sadd.s32 %s211, 1
      %p215 = scmp.eq.s32.totalorder %s20, 1
      %p216 = scmp.ne.s32.totalorder %s211, %s213
      %p217 = scmp.eq.s32.totalorder %s20, 0
      %p218 = por %p216, %p217
      %p219 = scmp.ne.s32.totalorder %s211, %s213
      %p220 = scmp.eq.s32.totalorder %s25, 1
      %p221 = por %p219, %p220
      %p222 = scmp.ne.s32.totalorder %s213, %s214
      %p223 = scmp.eq.s32.totalorder %s25, 0
      %p224 = por %p222, %p223
      %p225 = scmp.ne.s32.totalorder %s213, %s214
      %p226 = scmp.eq.s32.totalorder %s26, 1
      %p227 = por %p225, %p226
      %p229 = scmp.ne.s32.totalorder %s214, %s228
      %p230 = scmp.eq.s32.totalorder %s26, 0
      %p231 = por %p229, %p230
      %s233 = sadd.s32 %s232, 1
      %p236 = scmp.eq.s32.totalorder %s20, 1
      %p237 = scmp.ne.s32.totalorder %s232, %s234
      %p238 = scmp.eq.s32.totalorder %s20, 0
      %p239 = por %p237, %p238
      %p240 = scmp.ne.s32.totalorder %s232, %s234
      %p241 = scmp.eq.s32.totalorder %s25, 1
      %p242 = por %p240, %p241
      %p243 = scmp.ne.s32.totalorder %s234, %s235
      %p244 = scmp.eq.s32.totalorder %s25, 0
      %p245 = por %p243, %p244
      %p246 = scmp.ne.s32.totalorder %s234, %s235
      %p247 = scmp.eq.s32.totalorder %s26, 1
      %p248 = por %p246, %p247
      %p250 = scmp.ne.s32.totalorder %s235, %s249
      %p251 = scmp.eq.s32.totalorder %s26, 0
      %p252 = por %p250, %p251
      %s254 = sadd.s32 %s253, 1
      %p257 = scmp.eq.s32.totalorder %s20, 1
      %p258 = scmp.ne.s32.totalorder %s253, %s255
      %p259 = scmp.eq.s32.totalorder %s20, 0
      %p260 = por %p258, %p259
      %p261 = scmp.ne.s32.totalorder %s253, %s255
      %p262 = scmp.eq.s32.totalorder %s25, 1
      %p263 = por %p261, %p262
      %p264 = scmp.ne.s32.totalorder %s255, %s256
      %p265 = scmp.eq.s32.totalorder %s25, 0
      %p266 = por %p264, %p265
      %p267 = scmp.ne.s32.totalorder %s255, %s256
      %p268 = scmp.eq.s32.totalorder %s26, 1
      %p269 = por %p267, %p268
      %p271 = scmp.ne.s32.totalorder %s256, %s270
      %p272 = scmp.eq.s32.totalorder %s26, 0
      %p273 = por %p271, %p272
      %s275 = sadd.s32 %s274, 1
      %p278 = scmp.eq.s32.totalorder %s20, 1
      %p279 = scmp.ne.s32.totalorder %s274, %s276
      %p280 = scmp.eq.s32.totalorder %s20, 0
      %p281 = por %p279, %p280
      %p282 = scmp.ne.s32.totalorder %s274, %s276
      %p283 = scmp.eq.s32.totalorder %s25, 1
      %p284 = por %p282, %p283
      %p285 = scmp.ne.s32.totalorder %s276, %s277
      %p286 = scmp.eq.s32.totalorder %s25, 0
      %p287 = por %p285, %p286
      %p288 = scmp.ne.s32.totalorder %s276, %s277
      %p289 = scmp.eq.s32.totalorder %s26, 1
      %p290 = por %p288, %p289
      %p292 = scmp.ne.s32.totalorder %s277, %s291
      %p293 = scmp.eq.s32.totalorder %s26, 0
      %p294 = por %p292, %p293
      %s295 = ssub.s32 %s20, %s27
      %p296 = scmp.eq.s32.totalorder %s295, 0
      %s298 = sadd.s32 %s297, 1
      %s299 = scalar_select %p296, %s297, %s298
      %p302 = pneg %p296
      %p303 = scmp.eq.s32.totalorder %s20, 1
      %p304 = por %p302, %p303
      %p305 = scmp.ne.s32.totalorder %s297, %s300
      %p306 = scmp.eq.s32.totalorder %s20, 0
      %p307 = por %p305, %p306
      %p308 = scmp.ne.s32.totalorder %s297, %s300
      %p309 = scmp.eq.s32.totalorder %s25, 1
      %p310 = por %p308, %p309
      %p311 = scmp.ne.s32.totalorder %s300, %s301
      %p312 = scmp.eq.s32.totalorder %s25, 0
      %p313 = por %p311, %p312
      %p314 = scmp.ne.s32.totalorder %s300, %s301
      %p315 = scmp.eq.s32.totalorder %s26, 1
      %p316 = por %p314, %p315
      %p318 = scmp.ne.s32.totalorder %s301, %s317
      %p319 = scmp.eq.s32.totalorder %s26, 0
      %p320 = por %p318, %p319
      %p321 = scmp.le.s32.totalorder 1, %s20
      %p322 = scmp.lt.s32.totalorder %s20, 3
      %p323 = pnand %p321, %p322
      %p324 = pneg %p323
      // Predicated region
      $region9: #{transformer_block.1} parent=5 // pred_check
        _
      $region10: #{transformer_block.1} parent=5 // pred_check_branch
        %326 = sbr.rel (%p323) target = $region12
      $region11: #{transformer_block.1} parent=5 // pred_region
        %s327 = ssub.s32 %s20, 1
        // Predicated region
        $region13: #{transformer_block.1} parent=11 // pred_check
          %p328 = pneg %p119
        $region14: #{transformer_block.1} parent=11 // pred_check_branch
          %330 = sbr.rel (%p328) target = $region16
        $region15: #{transformer_block.1} parent=11 // pred_region
          _
        $region16: #{transformer_block.1} parent=11 // pred_fallthru
          _
        // Predicated region
        $region17: #{transformer_block.1} parent=11 // pred_check
          %p331 = pneg %p140
        $region18: #{transformer_block.1} parent=11 // pred_check_branch
          %333 = sbr.rel (%p331) target = $region20
        $region19: #{transformer_block.1} parent=11 // pred_region
          _
        $region20: #{transformer_block.1} parent=11 // pred_fallthru
          _
        // Predicated region
        $region21: #{transformer_block.1} parent=11 // pred_check
          %p334 = pneg %p161
        $region22: #{transformer_block.1} parent=11 // pred_check_branch
          %336 = sbr.rel (%p334) target = $region24
        $region23: #{transformer_block.1} parent=11 // pred_region
          _
        $region24: #{transformer_block.1} parent=11 // pred_fallthru
          _
        // Predicated region
        $region25: #{transformer_block.1} parent=11 // pred_check
          %p337 = pneg %p182
        $region26: #{transformer_block.1} parent=11 // pred_check_branch
          %339 = sbr.rel (%p337) target = $region28
        $region27: #{transformer_block.1} parent=11 // pred_region
          _
        $region28: #{transformer_block.1} parent=11 // pred_fallthru
          _
        // Predicated region
        $region29: #{transformer_block.1} parent=11 // pred_check
          %p340 = pneg %p203
        $region30: #{transformer_block.1} parent=11 // pred_check_branch
          %342 = sbr.rel (%p340) target = $region32
        $region31: #{transformer_block.1} parent=11 // pred_region
          %s344 = ssub.s32 512, 512
          %345 = vsyncadd [#allocation3], %s344
          %s346 = sshll.u32 [#allocation2], 4
          %s347 = int_to_ptr.vmem [resolvable:$true] %s346
          %352 = dma.hbm_to_vmem [thread:$0]  %s7, 512, %s347, [#allocation3], 128, 128, 8
        $region32: #{transformer_block.1} parent=11 // pred_fallthru
          _
        // Predicated region
        $region33: #{transformer_block.1} parent=11 // pred_check
          %p353 = pneg %p224
        $region34: #{transformer_block.1} parent=11 // pred_check_branch
          %355 = sbr.rel (%p353) target = $region36
        $region35: #{transformer_block.1} parent=11 // pred_region
          %s357 = ssub.s32 256, 256
          %358 = vsyncadd [#allocation5], %s357
          %s359 = sshll.u32 [#allocation4], 4
          %s360 = int_to_ptr.vmem [resolvable:$true] %s359
          %365 = dma.hbm_to_vmem [thread:$0]  %s8, 256, %s360, [#allocation5], 128, 128, 8
        $region36: #{transformer_block.1} parent=11 // pred_fallthru
          _
        // Predicated region
        $region37: #{transformer_block.1} parent=11 // pred_check
          %p366 = pneg %p245
        $region38: #{transformer_block.1} parent=11 // pred_check_branch
          %368 = sbr.rel (%p366) target = $region40
        $region39: #{transformer_block.1} parent=11 // pred_region
          _
        $region40: #{transformer_block.1} parent=11 // pred_fallthru
          _
        // Predicated region
        $region41: #{transformer_block.1} parent=11 // pred_check
          %p369 = pneg %p266
        $region42: #{transformer_block.1} parent=11 // pred_check_branch
          %371 = sbr.rel (%p369) target = $region44
        $region43: #{transformer_block.1} parent=11 // pred_region
          _
        $region44: #{transformer_block.1} parent=11 // pred_fallthru
          _
        // Predicated region
        $region45: #{transformer_block.1} parent=11 // pred_check
          %p372 = pneg %p287
        $region46: #{transformer_block.1} parent=11 // pred_check_branch
          %374 = sbr.rel (%p372) target = $region48
        $region47: #{transformer_block.1} parent=11 // pred_region
          %s376 = ssub.s32 128, 128
          %377 = vsyncadd [#allocation5], %s376
          %s379 = sshll.u32 [#allocation6], 4
          %s380 = int_to_ptr.vmem [resolvable:$true] %s379
          %382 = dma.hbm_to_vmem [thread:$0]  %s11, 128, %s380, [#allocation5]
        $region48: #{transformer_block.1} parent=11 // pred_fallthru
          _
      $region12: #{transformer_block.1} parent=5 // pred_fallthru
        _
      %p383 = scmp.lt.s32.totalorder %s20, 2
      // Predicated region
      $region49: #{transformer_block.1} parent=5 // pred_check
        %p384 = pneg %p383
      $region50: #{transformer_block.1} parent=5 // pred_check_branch
        %386 = sbr.rel (%p384) target = $region52
      $region51: #{transformer_block.1} parent=5 // pred_region
        // Predicated region
        $region53: #{transformer_block.1} parent=51 // pred_check
          %p387 = pneg %p40
        $region54: #{transformer_block.1} parent=51 // pred_check_branch
          %389 = sbr.rel (%p387) target = $region56
        $region55: #{transformer_block.1} parent=51 // pred_region
          %p390 = scmp.lt.s32.totalorder %s20, 1
          %s391 = scalar_select %p390, %s20, 1
          %s392 = smul.addr %s391, 8
          %s393 = scalar_lea.vmem %s0, %s392
        $region56: #{transformer_block.1} parent=51 // pred_fallthru
          _
        // Predicated region
        $region57: #{transformer_block.1} parent=51 // pred_check
          %p394 = pneg %p66
        $region58: #{transformer_block.1} parent=51 // pred_check_branch
          %396 = sbr.rel (%p394) target = $region60
        $region59: #{transformer_block.1} parent=51 // pred_region
          %p397 = scmp.lt.s32.totalorder %s20, 1
          %s398 = scalar_select %p397, %s20, 1
          %s399 = smul.addr %s398, 8
          %s400 = scalar_lea.vmem %s1, %s399
        $region60: #{transformer_block.1} parent=51 // pred_fallthru
          _
        // Predicated region
        $region61: #{transformer_block.1} parent=51 // pred_check
          %p401 = pneg %p92
        $region62: #{transformer_block.1} parent=51 // pred_check_branch
          %403 = sbr.rel (%p401) target = $region64
        $region63: #{transformer_block.1} parent=51 // pred_region
          %p404 = scmp.lt.s32.totalorder %s20, 1
          %s405 = scalar_select %p404, %s20, 1
          %s406 = smul.addr %s405, 8
          %s407 = scalar_lea.vmem %s2, %s406
        $region64: #{transformer_block.1} parent=51 // pred_fallthru
          _
      $region52: #{transformer_block.1} parent=5 // pred_fallthru
        _
      %p408 = scmp.le.s32.totalorder 1, %s20
      %p409 = scmp.lt.s32.totalorder %s20, 3
      %p410 = pnand %p408, %p409
      %p411 = pneg %p410
      // Predicated region
      $region65: #{transformer_block.1} parent=5 // pred_check
        _
      $region66: #{transformer_block.1} parent=5 // pred_check_branch
        %413 = sbr.rel (%p410) target = $region68
      $region67: #{transformer_block.1} parent=5 // pred_region
        %s414 = ssub.s32 %s20, 1
        // Predicated region
        $region69: #{transformer_block.1} parent=67 // pred_check
          %p415 = pneg %p203
        $region70: #{transformer_block.1} parent=67 // pred_check_branch
          %417 = sbr.rel (%p415) target = $region72
        $region71: #{transformer_block.1} parent=67 // pred_region
          %418 = dma.done [#allocation3], 512
        $region72: #{transformer_block.1} parent=67 // pred_fallthru
          _
        // Predicated region
        $region73: #{transformer_block.1} parent=67 // pred_check
          %p419 = pneg %p224
        $region74: #{transformer_block.1} parent=67 // pred_check_branch
          %421 = sbr.rel (%p419) target = $region76
        $region75: #{transformer_block.1} parent=67 // pred_region
          %422 = dma.done [#allocation5], 256
        $region76: #{transformer_block.1} parent=67 // pred_fallthru
          _
        // Predicated region
        $region77: #{transformer_block.1} parent=67 // pred_check
          %p423 = pneg %p287
        $region78: #{transformer_block.1} parent=67 // pred_check_branch
          %425 = sbr.rel (%p423) target = $region80
        $region79: #{transformer_block.1} parent=67 // pred_region
          %426 = dma.done [#allocation5], 128
        $region80: #{transformer_block.1} parent=67 // pred_fallthru
          _
        %p427 = scmp.lt.s32.totalorder %s25, 1
        %s428 = scalar_select %p427, %s25, 1
        %s429 = smul.addr %s428, 8
        %s430 = scalar_lea.vmem %s0, %s429
        %p431 = pneg %p46
        %p432 = pneg %p43
        %p433 = scmp.lt.s32.totalorder %s25, 1
        %s434 = scalar_select %p433, %s25, 1
        %s435 = smul.addr %s434, 8
        %s436 = scalar_lea.vmem %s1, %s435
        %p437 = pneg %p72
        %p438 = pneg %p69
        %p439 = scmp.lt.s32.totalorder %s25, 1
        %s440 = scalar_select %p439, %s25, 1
        %s441 = smul.addr %s440, 8
        %s442 = scalar_lea.vmem %s2, %s441
        %p443 = pneg %p98
        %p444 = pneg %p95
        %p445 = pneg %p119
        %p446 = pneg %p116
        %p447 = pneg %p140
        %p448 = pneg %p137
        %p449 = pneg %p161
        %p450 = pneg %p158
        %p451 = pneg %p182
        %p452 = pneg %p179
        %p453 = pneg %p203
        %p454 = pneg %p200
        %p455 = pneg %p224
        %p456 = pneg %p221
        %p457 = pneg %p245
        %p458 = pneg %p242
        %p459 = pneg %p266
        %p460 = pneg %p263
        %p461 = pneg %p287
        %p462 = pneg %p284
        %p463 = pneg %p313
        %p464 = pneg %p310
        %p465 = scmp.lt.s32.totalorder %s25, 1
        %s466 = scalar_select %p465, %s25, 1
        %s467 = smul.addr %s466, 8
        %s468 = scalar_lea.vmem %s12, %s467
        %p469 = scmp.lt.s32.totalorder %s25, 1
        %s470 = scalar_select %p469, %s25, 1
        %s471 = smul.addr %s470, 8
        %s472 = scalar_lea.vmem %s0, %s471
        %p473 = scmp.lt.s32.totalorder %s25, 1
        %s474 = scalar_select %p473, %s25, 1
        %s475 = smul.addr %s474, 8
        %s476 = scalar_lea.vmem %s1, %s475
        %p477 = scmp.lt.s32.totalorder %s25, 1
        %s478 = scalar_select %p477, %s25, 1
        %s479 = smul.addr %s478, 8
        %s480 = scalar_lea.vmem %s2, %s479
        %p481 = scmp.lt.s32.totalorder %s25, 1
        %s482 = scalar_select %p481, %s25, 1
        %s483 = smul.addr %s482, 8
        %s484 = scalar_lea.vmem %s12, %s483
        %v485 = vld [vmem:[#allocation4] sm:$0xff]
        %v486 = vld [vmem:[#allocation4 + $0x8] sm:$0xff]
        %v487 = vld [vmem:[%s472] sm:$0xff]
        %v488 = vld [vmem:[%s3] sm:$0xff]
        %v489 = vld [vmem:[%s3 + $0x8] sm:$0xff]
        %v490 = vld [vmem:[%s3 + $0x10] sm:$0xff]
        %v491 = vld [vmem:[%s3 + $0x18] sm:$0xff]
        %v492 = vlaneseq
        %v493 = vshrl.u32 %v492, 7
        %v494 = vsub.s32 0, %v493
        %v495 = vrot.slane %v485, %v494
        %vm496 = vcmask 261120
        %v498 = vsel %vm496, %v487, 0
        %500 = vmatprep.subr.mxu0 0.0
        %501 = vmatpush1.msra.mxu0 %v488
        %502 = vmatprep.subr.mxu0 0.0
        %503 = vmatpush1.msra.mxu0 %v489
        %504 = vmatprep.subr.mxu0 0.0
        %505 = vmatpush1.msra.mxu0 %v490
        %506 = vmatprep.subr.mxu0 0.0
        %507 = vmatpush1.msra.mxu0 %v491
        %508 = vmatprep.subr.mxu0 0.0
        %509 = vmatpush1.msra.mxu0 0.0
        %510 = vmatprep.subr.mxu0 0.0
        %511 = vmatpush1.msra.mxu0 0.0
        %512 = vmatprep.subr.mxu0 0.0
        %513 = vmatpush1.msra.mxu0 0.0
        %514 = vmatprep.subr.mxu0 0.0
        %515 = vmatpush1.msra.mxu0 0.0
        %516 = vmatprep.subr.mxu0 0.0
        %517 = vmatpush1.msra.mxu0 0.0
        %518 = vmatprep.subr.mxu0 0.0
        %519 = vmatpush1.msra.mxu0 0.0
        %520 = vmatprep.subr.mxu0 0.0
        %521 = vmatpush1.msra.mxu0 0.0
        %522 = vmatprep.subr.mxu0 0.0
        %523 = vmatpush1.msra.mxu0 0.0
        %524 = vmatprep.subr.mxu0 0.0
        %525 = vmatpush1.msra.mxu0 0.0
        %526 = vmatprep.subr.mxu0 0.0
        %527 = vmatpush1.msra.mxu0 0.0
        %528 = vmatprep.subr.mxu0 0.0
        %529 = vmatpush1.msra.mxu0 0.0
        %530 = vmatprep.subr.mxu0 0.0
        %531 = vmatpush1.msra.mxu0 0.0
        %532 = vmatprep.subr.mxu0 0.0
        %533 = vmatpush1.msra.mxu0 0.0
        %534 = vmatprep.subr.mxu0 0.0
        %535 = vmatpush1.msra.mxu0 0.0
        %536 = vmatprep.subr.mxu0 0.0
        %537 = vmatpush1.msra.mxu0 0.0
        %538 = vmatprep.subr.mxu0 0.0
        %539 = vmatpush1.msra.mxu0 0.0
        %540 = vmatprep.subr.mxu0 0.0
        %541 = vmatpush1.msra.mxu0 0.0
        %542 = vmatprep.subr.mxu0 0.0
        %543 = vmatpush1.msra.mxu0 0.0
        %544 = vmatprep.subr.mxu0 0.0
        %545 = vmatpush1.msra.mxu0 0.0
        %546 = vmatprep.subr.mxu0 0.0
        %547 = vmatpush1.msra.mxu0 0.0
        %548 = vmatprep.subr.mxu0 0.0
        %549 = vmatpush1.msra.mxu0 0.0
        %550 = vmatprep.subr.mxu0 0.0
        %551 = vmatpush1.msra.mxu0 0.0
        %552 = vmatprep.subr.mxu0 0.0
        %553 = vmatpush1.msra.mxu0 0.0
        %554 = vmatprep.subr.mxu0 0.0
        %555 = vmatpush1.msra.mxu0 0.0
        %556 = vmatprep.subr.mxu0 0.0
        %557 = vmatpush1.msra.mxu0 0.0
        %558 = vmatprep.subr.mxu0 0.0
        %559 = vmatpush1.msra.mxu0 0.0
        %560 = vmatprep.subr.mxu0 0.0
        %561 = vmatpush1.msra.mxu0 0.0
        %562 = vmatprep.subr.mxu0 0.0
        %563 = vmatpush1.msra.mxu0 0.0
        %564 = vmatprep.mubr.f32.mxu0 0.0
        %565 = vmatmul.mubr.f32.gmra.mrb[0].mxu0 %v498
        %v566 = vpop.f32.mrb[0].mxu0
        %v567 = vadd.f32 %v495, %v566
        %v568 = vpop.f32.mrb[0].mxu0
        %569 = vdwg.mxu0
        %v570 = vld [vmem:[%s476] sm:$0xff]
        %v571 = vld [vmem:[%s4] sm:$0xff]
        %v572 = vld [vmem:[%s4 + $0x8] sm:$0xff]
        %v573 = vld [vmem:[%s4 + $0x10] sm:$0xff]
        %v574 = vld [vmem:[%s4 + $0x18] sm:$0xff]
        %v575 = vlaneseq
        %v576 = vshrl.u32 %v575, 7
        %v577 = vsub.s32 1, %v576
        %v578 = vrot.slane %v485, %v577
        %v580 = vsel %vm496, %v570, 0
        %582 = vmatprep.subr.mxu0 0.0
        %583 = vmatpush1.msra.mxu0 %v571
        %584 = vmatprep.subr.mxu0 0.0
        %585 = vmatpush1.msra.mxu0 %v572
        %586 = vmatprep.subr.mxu0 0.0
        %587 = vmatpush1.msra.mxu0 %v573
        %588 = vmatprep.subr.mxu0 0.0
        %589 = vmatpush1.msra.mxu0 %v574
        %590 = vmatprep.subr.mxu0 0.0
        %591 = vmatpush1.msra.mxu0 0.0
        %592 = vmatprep.subr.mxu0 0.0
        %593 = vmatpush1.msra.mxu0 0.0
        %594 = vmatprep.subr.mxu0 0.0
        %595 = vmatpush1.msra.mxu0 0.0
        %596 = vmatprep.subr.mxu0 0.0
        %597 = vmatpush1.msra.mxu0 0.0
        %598 = vmatprep.subr.mxu0 0.0
        %599 = vmatpush1.msra.mxu0 0.0
        %600 = vmatprep.subr.mxu0 0.0
        %601 = vmatpush1.msra.mxu0 0.0
        %602 = vmatprep.subr.mxu0 0.0
        %603 = vmatpush1.msra.mxu0 0.0
        %604 = vmatprep.subr.mxu0 0.0
        %605 = vmatpush1.msra.mxu0 0.0
        %606 = vmatprep.subr.mxu0 0.0
        %607 = vmatpush1.msra.mxu0 0.0
        %608 = vmatprep.subr.mxu0 0.0
        %609 = vmatpush1.msra.mxu0 0.0
        %610 = vmatprep.subr.mxu0 0.0
        %611 = vmatpush1.msra.mxu0 0.0
        %612 = vmatprep.subr.mxu0 0.0
        %613 = vmatpush1.msra.mxu0 0.0
        %614 = vmatprep.subr.mxu0 0.0
        %615 = vmatpush1.msra.mxu0 0.0
        %616 = vmatprep.subr.mxu0 0.0
        %617 = vmatpush1.msra.mxu0 0.0
        %618 = vmatprep.subr.mxu0 0.0
        %619 = vmatpush1.msra.mxu0 0.0
        %620 = vmatprep.subr.mxu0 0.0
        %621 = vmatpush1.msra.mxu0 0.0
        %622 = vmatprep.subr.mxu0 0.0
        %623 = vmatpush1.msra.mxu0 0.0
        %624 = vmatprep.subr.mxu0 0.0
        %625 = vmatpush1.msra.mxu0 0.0
        %626 = vmatprep.subr.mxu0 0.0
        %627 = vmatpush1.msra.mxu0 0.0
        %628 = vmatprep.subr.mxu0 0.0
        %629 = vmatpush1.msra.mxu0 0.0
        %630 = vmatprep.subr.mxu0 0.0
        %631 = vmatpush1.msra.mxu0 0.0
        %632 = vmatprep.subr.mxu0 0.0
        %633 = vmatpush1.msra.mxu0 0.0
        %634 = vmatprep.subr.mxu0 0.0
        %635 = vmatpush1.msra.mxu0 0.0
        %636 = vmatprep.subr.mxu0 0.0
        %637 = vmatpush1.msra.mxu0 0.0
        %638 = vmatprep.subr.mxu0 0.0
        %639 = vmatpush1.msra.mxu0 0.0
        %640 = vmatprep.subr.mxu0 0.0
        %641 = vmatpush1.msra.mxu0 0.0
        %642 = vmatprep.subr.mxu0 0.0
        %643 = vmatpush1.msra.mxu0 0.0
        %644 = vmatprep.subr.mxu0 0.0
        %645 = vmatpush1.msra.mxu0 0.0
        %646 = vmatprep.mubr.f32.mxu0 0.0
        %647 = vmatmul.mubr.f32.gmra.mrb[0].mxu0 %v580
        %v648 = vpop.f32.mrb[0].mxu0
        %v649 = vadd.f32 %v578, %v648
        %v650 = vpop.f32.mrb[0].mxu0
        %651 = vdwg.mxu0
        %v652 = vld [vmem:[%s480] sm:$0xff]
        %v653 = vld [vmem:[%s5] sm:$0xff]
        %v654 = vld [vmem:[%s5 + $0x8] sm:$0xff]
        %v655 = vld [vmem:[%s5 + $0x10] sm:$0xff]
        %v656 = vld [vmem:[%s5 + $0x18] sm:$0xff]
        %v657 = vlaneseq
        %v658 = vshrl.u32 %v657, 7
        %v659 = vsub.s32 2, %v658
        %v660 = vrot.slane %v485, %v659
        %v662 = vsel %vm496, %v652, 0
        %664 = vmatprep.subr.mxu0 0.0
        %665 = vmatpush1.msra.mxu0 %v653
        %666 = vmatprep.subr.mxu0 0.0
        %667 = vmatpush1.msra.mxu0 %v654
        %668 = vmatprep.subr.mxu0 0.0
        %669 = vmatpush1.msra.mxu0 %v655
        %670 = vmatprep.subr.mxu0 0.0
        %671 = vmatpush1.msra.mxu0 %v656
        %672 = vmatprep.subr.mxu0 0.0
        %673 = vmatpush1.msra.mxu0 0.0
        %674 = vmatprep.subr.mxu0 0.0
        %675 = vmatpush1.msra.mxu0 0.0
        %676 = vmatprep.subr.mxu0 0.0
        %677 = vmatpush1.msra.mxu0 0.0
        %678 = vmatprep.subr.mxu0 0.0
        %679 = vmatpush1.msra.mxu0 0.0
        %680 = vmatprep.subr.mxu0 0.0
        %681 = vmatpush1.msra.mxu0 0.0
        %682 = vmatprep.subr.mxu0 0.0
        %683 = vmatpush1.msra.mxu0 0.0
        %684 = vmatprep.subr.mxu0 0.0
        %685 = vmatpush1.msra.mxu0 0.0
        %686 = vmatprep.subr.mxu0 0.0
        %687 = vmatpush1.msra.mxu0 0.0
        %688 = vmatprep.subr.mxu0 0.0
        %689 = vmatpush1.msra.mxu0 0.0
        %690 = vmatprep.subr.mxu0 0.0
        %691 = vmatpush1.msra.mxu0 0.0
        %692 = vmatprep.subr.mxu0 0.0
        %693 = vmatpush1.msra.mxu0 0.0
        %694 = vmatprep.subr.mxu0 0.0
        %695 = vmatpush1.msra.mxu0 0.0
        %696 = vmatprep.subr.mxu0 0.0
        %697 = vmatpush1.msra.mxu0 0.0
        %698 = vmatprep.subr.mxu0 0.0
        %699 = vmatpush1.msra.mxu0 0.0
        %700 = vmatprep.subr.mxu0 0.0
        %701 = vmatpush1.msra.mxu0 0.0
        %702 = vmatprep.subr.mxu0 0.0
        %703 = vmatpush1.msra.mxu0 0.0
        %704 = vmatprep.subr.mxu0 0.0
        %705 = vmatpush1.msra.mxu0 0.0
        %706 = vmatprep.subr.mxu0 0.0
        %707 = vmatpush1.msra.mxu0 0.0
        %708 = vmatprep.subr.mxu0 0.0
        %709 = vmatpush1.msra.mxu0 0.0
        %710 = vmatprep.subr.mxu0 0.0
        %711 = vmatpush1.msra.mxu0 0.0
        %712 = vmatprep.subr.mxu0 0.0
        %713 = vmatpush1.msra.mxu0 0.0
        %714 = vmatprep.subr.mxu0 0.0
        %715 = vmatpush1.msra.mxu0 0.0
        %716 = vmatprep.subr.mxu0 0.0
        %717 = vmatpush1.msra.mxu0 0.0
        %718 = vmatprep.subr.mxu0 0.0
        %719 = vmatpush1.msra.mxu0 0.0
        %720 = vmatprep.subr.mxu0 0.0
        %721 = vmatpush1.msra.mxu0 0.0
        %722 = vmatprep.subr.mxu0 0.0
        %723 = vmatpush1.msra.mxu0 0.0
        %724 = vmatprep.subr.mxu0 0.0
        %725 = vmatpush1.msra.mxu0 0.0
        %726 = vmatprep.subr.mxu0 0.0
        %727 = vmatpush1.msra.mxu0 0.0
        %728 = vmatprep.mubr.f32.mxu0 0.0
        %729 = vmatmul.mubr.f32.gmra.mrb[0].mxu0 %v662
        %v730 = vpop.f32.mrb[0].mxu0
        %v731 = vadd.f32 %v660, %v730
        %v732 = vpop.f32.mrb[0].mxu0
        %733 = vdwg.mxu0
        %v734 = vld [vmem:[%s10] sm:$0xff]
        %v735 = vld [vmem:[%s10 + $0x8] sm:$0xff]
        %v736 = vld [vmem:[%s10 + $0x10] sm:$0xff]
        %v737 = vld [vmem:[%s10 + $0x18] sm:$0xff]
        %v738 = vld [vmem:[%s10 + $0x20] sm:$0xff]
        %v739 = vld [vmem:[%s10 + $0x28] sm:$0xff]
        %v740 = vld [vmem:[%s10 + $0x30] sm:$0xff]
        %v741 = vld [vmem:[%s10 + $0x38] sm:$0xff]
        %v742 = vld [vmem:[%s9] sm:$0xff]
        %v743 = vld [vmem:[%s9 + $0x8] sm:$0xff]
        %v744 = vld [vmem:[%s9 + $0x10] sm:$0xff]
        %v745 = vld [vmem:[%s9 + $0x18] sm:$0xff]
        %v746 = vld [vmem:[%s9 + $0x20] sm:$0xff]
        %v747 = vld [vmem:[%s9 + $0x28] sm:$0xff]
        %v748 = vld [vmem:[%s9 + $0x30] sm:$0xff]
        %v749 = vld [vmem:[%s9 + $0x38] sm:$0xff]
        %vm750 = vcmask 64512
        %v752 = vsel %vm750, %v742, 0
        %v755 = vsel %vm750, %v743, 0
        %v758 = vsel %vm750, %v744, 0
        %v761 = vsel %vm750, %v745, 0
        %v764 = vsel %vm750, %v746, 0
        %v767 = vsel %vm750, %v747, 0
        %v770 = vsel %vm750, %v748, 0
        %v773 = vsel %vm750, %v749, 0
        %775 = vmatprep.subr.mxu0 0.0
        %776 = vmatpush1.msra.mxu0 %v567
        %777 = vmatprep.subr.mxu0 0.0
        %778 = vmatpush1.msra.mxu0 0.0
        %779 = vmatprep.subr.mxu0 0.0
        %780 = vmatpush1.msra.mxu0 0.0
        %781 = vmatprep.subr.mxu0 0.0
        %782 = vmatpush1.msra.mxu0 0.0
        %783 = vmatprep.subr.mxu0 0.0
        %784 = vmatpush1.msra.mxu0 0.0
        %785 = vmatprep.subr.mxu0 0.0
        %786 = vmatpush1.msra.mxu0 0.0
        %787 = vmatprep.subr.mxu0 0.0
        %788 = vmatpush1.msra.mxu0 0.0
        %789 = vmatprep.subr.mxu0 0.0
        %790 = vmatpush1.msra.mxu0 0.0
        %791 = vmatprep.subr.mxu0 0.0
        %792 = vmatpush1.msra.mxu0 0.0
        %793 = vmatprep.subr.mxu0 0.0
        %794 = vmatpush1.msra.mxu0 0.0
        %795 = vmatprep.subr.mxu0 0.0
        %796 = vmatpush1.msra.mxu0 0.0
        %797 = vmatprep.subr.mxu0 0.0
        %798 = vmatpush1.msra.mxu0 0.0
        %799 = vmatprep.subr.mxu0 0.0
        %800 = vmatpush1.msra.mxu0 0.0
        %801 = vmatprep.subr.mxu0 0.0
        %802 = vmatpush1.msra.mxu0 0.0
        %803 = vmatprep.subr.mxu0 0.0
        %804 = vmatpush1.msra.mxu0 0.0
        %805 = vmatprep.subr.mxu0 0.0
        %806 = vmatpush1.msra.mxu0 0.0
        %807 = vmatprep.subr.mxu0 0.0
        %808 = vmatpush1.msra.mxu0 0.0
        %809 = vmatprep.subr.mxu0 0.0
        %810 = vmatpush1.msra.mxu0 0.0
        %811 = vmatprep.subr.mxu0 0.0
        %812 = vmatpush1.msra.mxu0 0.0
        %813 = vmatprep.subr.mxu0 0.0
        %814 = vmatpush1.msra.mxu0 0.0
        %815 = vmatprep.subr.mxu0 0.0
        %816 = vmatpush1.msra.mxu0 0.0
        %817 = vmatprep.subr.mxu0 0.0
        %818 = vmatpush1.msra.mxu0 0.0
        %819 = vmatprep.subr.mxu0 0.0
        %820 = vmatpush1.msra.mxu0 0.0
        %821 = vmatprep.subr.mxu0 0.0
        %822 = vmatpush1.msra.mxu0 0.0
        %823 = vmatprep.subr.mxu0 0.0
        %824 = vmatpush1.msra.mxu0 0.0
        %825 = vmatprep.subr.mxu0 0.0
        %826 = vmatpush1.msra.mxu0 0.0
        %827 = vmatprep.subr.mxu0 0.0
        %828 = vmatpush1.msra.mxu0 0.0
        %829 = vmatprep.subr.mxu0 0.0
        %830 = vmatpush1.msra.mxu0 0.0
        %831 = vmatprep.subr.mxu0 0.0
        %832 = vmatpush1.msra.mxu0 0.0
        %833 = vmatprep.subr.mxu0 0.0
        %834 = vmatpush1.msra.mxu0 0.0
        %835 = vmatprep.subr.mxu0 0.0
        %836 = vmatpush1.msra.mxu0 0.0
        %837 = vmatprep.subr.mxu0 0.0
        %838 = vmatpush1.msra.mxu0 0.0
        %839 = vmatprep.mubr.f32.mxu0 0.0
        %840 = vmatmul.mubr.f32.gmra.mrb[0].mxu0 %v752
        %v841 = vpop.f32.mrb[0].mxu0
        %v842 = vadd.f32 0.0, %v841
        %v843 = vpop.f32.mrb[0].mxu0
        %844 = vmatprep.mubr.f32.mxu0 0.0
        %845 = vmatmul.mubr.f32.gmra.mrb[0].mxu0 %v755
        %v846 = vpop.f32.mrb[0].mxu0
        %v847 = vadd.f32 0.0, %v846
        %v848 = vpop.f32.mrb[0].mxu0
        %849 = vmatprep.mubr.f32.mxu0 0.0
        %850 = vmatmul.mubr.f32.gmra.mrb[0].mxu0 %v758
        %v851 = vpop.f32.mrb[0].mxu0
        %v852 = vadd.f32 0.0, %v851
        %v853 = vpop.f32.mrb[0].mxu0
        %854 = vmatprep.mubr.f32.mxu0 0.0
        %855 = vmatmul.mubr.f32.gmra.mrb[0].mxu0 %v761
        %v856 = vpop.f32.mrb[0].mxu0
        %v857 = vadd.f32 0.0, %v856
        %v858 = vpop.f32.mrb[0].mxu0
        %859 = vmatprep.mubr.f32.mxu0 0.0
        %860 = vmatmul.mubr.f32.gmra.mrb[0].mxu0 %v764
        %v861 = vpop.f32.mrb[0].mxu0
        %v862 = vadd.f32 0.0, %v861
        %v863 = vpop.f32.mrb[0].mxu0
        %864 = vmatprep.mubr.f32.mxu0 0.0
        %865 = vmatmul.mubr.f32.gmra.mrb[0].mxu0 %v767
        %v866 = vpop.f32.mrb[0].mxu0
        %v867 = vadd.f32 0.0, %v866
        %v868 = vpop.f32.mrb[0].mxu0
        %869 = vmatprep.mubr.f32.mxu0 0.0
        %870 = vmatmul.mubr.f32.gmra.mrb[0].mxu0 %v770
        %v871 = vpop.f32.mrb[0].mxu0
        %v872 = vadd.f32 0.0, %v871
        %v873 = vpop.f32.mrb[0].mxu0
        %874 = vmatprep.mubr.f32.mxu0 0.0
        %875 = vmatmul.mubr.f32.gmra.mrb[0].mxu0 %v773
        %v876 = vpop.f32.mrb[0].mxu0
        %v877 = vadd.f32 0.0, %v876
        %v878 = vpop.f32.mrb[0].mxu0
        %879 = vdwg.mxu0
        %v880 = vmul.f32 %v842, %v734
        %v881 = vmul.f32 %v847, %v735
        %v882 = vmul.f32 %v852, %v736
        %v883 = vmul.f32 %v857, %v737
        %v884 = vmul.f32 %v862, %v738
        %v885 = vmul.f32 %v867, %v739
        %v886 = vmul.f32 %v872, %v740
        %v887 = vmul.f32 %v877, %v741
        %v889 = vsel %vm496, %v649, 0
        %v892 = vsel %vm496, %v880, 0
        %v895 = vsel %vm496, %v881, 0
        %v898 = vsel %vm496, %v882, 0
        %v901 = vsel %vm496, %v883, 0
        %v904 = vsel %vm496, %v884, 0
        %v907 = vsel %vm496, %v885, 0
        %v910 = vsel %vm496, %v886, 0
        %v913 = vsel %vm496, %v887, 0
        %915 = vmatprep.subr.mxu0 0.0
        %916 = vmatpush1.xpose.msra.mxu0 %v892
        %917 = vmatprep.subr.mxu0 0.0
        %918 = vmatpush1.xpose.msra.mxu0 %v895
        %919 = vmatprep.subr.mxu0 0.0
        %920 = vmatpush1.xpose.msra.mxu0 %v898
        %921 = vmatprep.subr.mxu0 0.0
        %922 = vmatpush1.xpose.msra.mxu0 %v901
        %923 = vmatprep.subr.mxu0 0.0
        %924 = vmatpush1.xpose.msra.mxu0 %v904
        %925 = vmatprep.subr.mxu0 0.0
        %926 = vmatpush1.xpose.msra.mxu0 %v907
        %927 = vmatprep.subr.mxu0 0.0
        %928 = vmatpush1.xpose.msra.mxu0 %v910
        %929 = vmatprep.subr.mxu0 0.0
        %930 = vmatpush1.xpose.msra.mxu0 %v913
        %931 = vmatprep.subr.mxu0 0.0
        %932 = vmatpush1.xpose.msra.mxu0 0.0
        %933 = vmatprep.subr.mxu0 0.0
        %934 = vmatpush1.xpose.msra.mxu0 0.0
        %935 = vmatprep.subr.mxu0 0.0
        %936 = vmatpush1.xpose.msra.mxu0 0.0
        %937 = vmatprep.subr.mxu0 0.0
        %938 = vmatpush1.xpose.msra.mxu0 0.0
        %939 = vmatprep.subr.mxu0 0.0
        %940 = vmatpush1.xpose.msra.mxu0 0.0
        %941 = vmatprep.subr.mxu0 0.0
        %942 = vmatpush1.xpose.msra.mxu0 0.0
        %943 = vmatprep.subr.mxu0 0.0
        %944 = vmatpush1.xpose.msra.mxu0 0.0
        %945 = vmatprep.subr.mxu0 0.0
        %946 = vmatpush1.xpose.msra.mxu0 0.0
        %947 = vmatprep.subr.mxu0 0.0
        %948 = vmatpush1.xpose.msra.mxu0 0.0
        %949 = vmatprep.subr.mxu0 0.0
        %950 = vmatpush1.xpose.msra.mxu0 0.0
        %951 = vmatprep.subr.mxu0 0.0
        %952 = vmatpush1.xpose.msra.mxu0 0.0
        %953 = vmatprep.subr.mxu0 0.0
        %954 = vmatpush1.xpose.msra.mxu0 0.0
        %955 = vmatprep.subr.mxu0 0.0
        %956 = vmatpush1.xpose.msra.mxu0 0.0
        %957 = vmatprep.subr.mxu0 0.0
        %958 = vmatpush1.xpose.msra.mxu0 0.0
        %959 = vmatprep.subr.mxu0 0.0
        %960 = vmatpush1.xpose.msra.mxu0 0.0
        %961 = vmatprep.subr.mxu0 0.0
        %962 = vmatpush1.xpose.msra.mxu0 0.0
        %963 = vmatprep.subr.mxu0 0.0
        %964 = vmatpush1.xpose.msra.mxu0 0.0
        %965 = vmatprep.subr.mxu0 0.0
        %966 = vmatpush1.xpose.msra.mxu0 0.0
        %967 = vmatprep.subr.mxu0 0.0
        %968 = vmatpush1.xpose.msra.mxu0 0.0
        %969 = vmatprep.subr.mxu0 0.0
        %970 = vmatpush1.xpose.msra.mxu0 0.0
        %971 = vmatprep.subr.mxu0 0.0
        %972 = vmatpush1.xpose.msra.mxu0 0.0
        %973 = vmatprep.subr.mxu0 0.0
        %974 = vmatpush1.xpose.msra.mxu0 0.0
        %975 = vmatprep.subr.mxu0 0.0
        %976 = vmatpush1.xpose.msra.mxu0 0.0
        %977 = vmatprep.subr.mxu0 0.0
        %978 = vmatpush1.xpose.msra.mxu0 0.0
        %979 = vmatprep.mubr.f32.mxu0 0.0
        %980 = vmatmul.mubr.f32.gmra.mrb[0].mxu0 %v889
        %v981 = vpop.f32.mrb[0].mxu0
        %v982 = vadd.f32 0.0, %v981
        %v983 = vpop.f32.mrb[0].mxu0
        %984 = vdwg.mxu0
        %vm985 = vcmask 523264
        %v986 = vsel %vm985, %v982, -inf
        %v987 = vrot.slane %v986, 4
        %v988 = vmax.f32 %v986, %v987
        %v989 = vrot.slane %v988, 2
        %v990 = vmax.f32 %v988, %v989
        %v991 = vrot.slane %v990, 1
        %v992 = vmax.f32 %v990, %v991
        %v993 = vsub.f32 %v982, %v992
        %v994 = vmul.f32 %v993, 1.442695
        %v995 = vpow.pop %v994
        %v996 = vsel %vm985, %v995, 0.0
        %v997 = vrot.slane %v996, 4
        %v998 = vadd.f32 %v996, %v997
        %v999 = vrot.slane %v998, 2
        %v1000 = vadd.f32 %v998, %v999
        %v1001 = vrot.slane %v1000, 1
        %v1002 = vadd.f32 %v1000, %v1001
        %v1003 = vrcp.pop %v1002
        %v1004 = vmul.f32 %v995, %v1003
        %1005 = vxpose.xlu0.b32.start [1/16] %v1004, 128
        %1006 = vxpose.xlu0.b32.cont [2/16] 0.0, 128
        %1007 = vxpose.xlu0.b32.cont [3/16] 0.0, 128
        %1008 = vxpose.xlu0.b32.cont [4/16] 0.0, 128
        %1009 = vxpose.xlu0.b32.cont [5/16] 0.0, 128
        %1010 = vxpose.xlu0.b32.cont [6/16] 0.0, 128
        %1011 = vxpose.xlu0.b32.cont [7/16] 0.0, 128
        %1012 = vxpose.xlu0.b32.cont [8/16] 0.0, 128
        %1013 = vxpose.xlu0.b32.cont [9/16] 0.0, 128
        %1014 = vxpose.xlu0.b32.cont [10/16] 0.0, 128
        %1015 = vxpose.xlu0.b32.cont [11/16] 0.0, 128
        %1016 = vxpose.xlu0.b32.cont [12/16] 0.0, 128
        %1017 = vxpose.xlu0.b32.cont [13/16] 0.0, 128
        %1018 = vxpose.xlu0.b32.cont [14/16] 0.0, 128
        %1019 = vxpose.xlu0.b32.cont [15/16] 0.0, 128
        %1020 = vxpose.xlu0.b32.end [16/16] 0.0, 128
        %v1021 = vpop.trf.xlu0
        %v1022 = vpop.trf.xlu0
        %v1023 = vpop.trf.xlu0
        %v1024 = vpop.trf.xlu0
        %v1025 = vpop.trf.xlu0
        %v1026 = vpop.trf.xlu0
        %v1027 = vpop.trf.xlu0
        %v1028 = vpop.trf.xlu0
        %v1029 = vpop.trf.xlu0
        %v1030 = vpop.trf.xlu0
        %v1031 = vpop.trf.xlu0
        %v1032 = vpop.trf.xlu0
        %v1033 = vpop.trf.xlu0
        %v1034 = vpop.trf.xlu0
        %v1035 = vpop.trf.xlu0
        %v1036 = vpop.trf.xlu0
        %v1038 = vsel %vm750, %v1021, 0
        %v1041 = vsel %vm750, %v1022, 0
        %v1044 = vsel %vm750, %v1023, 0
        %v1047 = vsel %vm750, %v1024, 0
        %v1050 = vsel %vm750, %v1025, 0
        %v1053 = vsel %vm750, %v1026, 0
        %v1056 = vsel %vm750, %v1027, 0
        %v1059 = vsel %vm750, %v1028, 0
        %1061 = vmatprep.subr.mxu0 0.0
        %1062 = vmatpush1.msra.mxu0 %v731
        %1063 = vmatprep.subr.mxu0 0.0
        %1064 = vmatpush1.msra.mxu0 0.0
        %1065 = vmatprep.subr.mxu0 0.0
        %1066 = vmatpush1.msra.mxu0 0.0
        %1067 = vmatprep.subr.mxu0 0.0
        %1068 = vmatpush1.msra.mxu0 0.0
        %1069 = vmatprep.subr.mxu0 0.0
        %1070 = vmatpush1.msra.mxu0 0.0
        %1071 = vmatprep.subr.mxu0 0.0
        %1072 = vmatpush1.msra.mxu0 0.0
        %1073 = vmatprep.subr.mxu0 0.0
        %1074 = vmatpush1.msra.mxu0 0.0
        %1075 = vmatprep.subr.mxu0 0.0
        %1076 = vmatpush1.msra.mxu0 0.0
        %1077 = vmatprep.subr.mxu0 0.0
        %1078 = vmatpush1.msra.mxu0 0.0
        %1079 = vmatprep.subr.mxu0 0.0
        %1080 = vmatpush1.msra.mxu0 0.0
        %1081 = vmatprep.subr.mxu0 0.0
        %1082 = vmatpush1.msra.mxu0 0.0
        %1083 = vmatprep.subr.mxu0 0.0
        %1084 = vmatpush1.msra.mxu0 0.0
        %1085 = vmatprep.subr.mxu0 0.0
        %1086 = vmatpush1.msra.mxu0 0.0
        %1087 = vmatprep.subr.mxu0 0.0
        %1088 = vmatpush1.msra.mxu0 0.0
        %1089 = vmatprep.subr.mxu0 0.0
        %1090 = vmatpush1.msra.mxu0 0.0
        %1091 = vmatprep.subr.mxu0 0.0
        %1092 = vmatpush1.msra.mxu0 0.0
        %1093 = vmatprep.subr.mxu0 0.0
        %1094 = vmatpush1.msra.mxu0 0.0
        %1095 = vmatprep.subr.mxu0 0.0
        %1096 = vmatpush1.msra.mxu0 0.0
        %1097 = vmatprep.subr.mxu0 0.0
        %1098 = vmatpush1.msra.mxu0 0.0
        %1099 = vmatprep.subr.mxu0 0.0
        %1100 = vmatpush1.msra.mxu0 0.0
        %1101 = vmatprep.subr.mxu0 0.0
        %1102 = vmatpush1.msra.mxu0 0.0
        %1103 = vmatprep.subr.mxu0 0.0
        %1104 = vmatpush1.msra.mxu0 0.0
        %1105 = vmatprep.subr.mxu0 0.0
        %1106 = vmatpush1.msra.mxu0 0.0
        %1107 = vmatprep.subr.mxu0 0.0
        %1108 = vmatpush1.msra.mxu0 0.0
        %1109 = vmatprep.subr.mxu0 0.0
        %1110 = vmatpush1.msra.mxu0 0.0
        %1111 = vmatprep.subr.mxu0 0.0
        %1112 = vmatpush1.msra.mxu0 0.0
        %1113 = vmatprep.subr.mxu0 0.0
        %1114 = vmatpush1.msra.mxu0 0.0
        %1115 = vmatprep.subr.mxu0 0.0
        %1116 = vmatpush1.msra.mxu0 0.0
        %1117 = vmatprep.subr.mxu0 0.0
        %1118 = vmatpush1.msra.mxu0 0.0
        %1119 = vmatprep.subr.mxu0 0.0
        %1120 = vmatpush1.msra.mxu0 0.0
        %1121 = vmatprep.subr.mxu0 0.0
        %1122 = vmatpush1.msra.mxu0 0.0
        %1123 = vmatprep.subr.mxu0 0.0
        %1124 = vmatpush1.msra.mxu0 0.0
        %1125 = vmatprep.mubr.f32.mxu0 0.0
        %1126 = vmatmul.mubr.f32.gmra.mrb[0].mxu0 %v1038
        %v1127 = vpop.f32.mrb[0].mxu0
        %v1128 = vadd.f32 0.0, %v1127
        %v1129 = vpop.f32.mrb[0].mxu0
        %1130 = vmatprep.mubr.f32.mxu0 0.0
        %1131 = vmatmul.mubr.f32.gmra.mrb[0].mxu0 %v1041
        %v1132 = vpop.f32.mrb[0].mxu0
        %v1133 = vadd.f32 0.0, %v1132
        %v1134 = vpop.f32.mrb[0].mxu0
        %1135 = vmatprep.mubr.f32.mxu0 0.0
        %1136 = vmatmul.mubr.f32.gmra.mrb[0].mxu0 %v1044
        %v1137 = vpop.f32.mrb[0].mxu0
        %v1138 = vadd.f32 0.0, %v1137
        %v1139 = vpop.f32.mrb[0].mxu0
        %1140 = vmatprep.mubr.f32.mxu0 0.0
        %1141 = vmatmul.mubr.f32.gmra.mrb[0].mxu0 %v1047
        %v1142 = vpop.f32.mrb[0].mxu0
        %v1143 = vadd.f32 0.0, %v1142
        %v1144 = vpop.f32.mrb[0].mxu0
        %1145 = vmatprep.mubr.f32.mxu0 0.0
        %1146 = vmatmul.mubr.f32.gmra.mrb[0].mxu0 %v1050
        %v1147 = vpop.f32.mrb[0].mxu0
        %v1148 = vadd.f32 0.0, %v1147
        %v1149 = vpop.f32.mrb[0].mxu0
        %1150 = vmatprep.mubr.f32.mxu0 0.0
        %1151 = vmatmul.mubr.f32.gmra.mrb[0].mxu0 %v1053
        %v1152 = vpop.f32.mrb[0].mxu0
        %v1153 = vadd.f32 0.0, %v1152
        %v1154 = vpop.f32.mrb[0].mxu0
        %1155 = vmatprep.mubr.f32.mxu0 0.0
        %1156 = vmatmul.mubr.f32.gmra.mrb[0].mxu0 %v1056
        %v1157 = vpop.f32.mrb[0].mxu0
        %v1158 = vadd.f32 0.0, %v1157
        %v1159 = vpop.f32.mrb[0].mxu0
        %1160 = vmatprep.mubr.f32.mxu0 0.0
        %1161 = vmatmul.mubr.f32.gmra.mrb[0].mxu0 %v1059
        %v1162 = vpop.f32.mrb[0].mxu0
        %v1163 = vadd.f32 0.0, %v1162
        %v1164 = vpop.f32.mrb[0].mxu0
        %1165 = vdwg.mxu0
        %v1166 = vmul.f32 %v1128, %v734
        %v1167 = vmul.f32 %v1133, %v735
        %v1168 = vmul.f32 %v1138, %v736
        %v1169 = vmul.f32 %v1143, %v737
        %v1170 = vmul.f32 %v1148, %v738
        %v1171 = vmul.f32 %v1153, %v739
        %v1172 = vmul.f32 %v1158, %v740
        %v1173 = vmul.f32 %v1163, %v741
        %v1174 = vld [vmem:[#allocation6] sm:$0xff]
        %v1176 = vsel %vm985, %v1174, 0
        %1178 = vmatprep.subr.mxu0 0.0
        %1179 = vmatpush1.msra.mxu0 %v1166
        %1180 = vmatprep.subr.mxu0 0.0
        %1181 = vmatpush1.msra.mxu0 %v1167
        %1182 = vmatprep.subr.mxu0 0.0
        %1183 = vmatpush1.msra.mxu0 %v1168
        %1184 = vmatprep.subr.mxu0 0.0
        %1185 = vmatpush1.msra.mxu0 %v1169
        %1186 = vmatprep.subr.mxu0 0.0
        %1187 = vmatpush1.msra.mxu0 %v1170
        %1188 = vmatprep.subr.mxu0 0.0
        %1189 = vmatpush1.msra.mxu0 %v1171
        %1190 = vmatprep.subr.mxu0 0.0
        %1191 = vmatpush1.msra.mxu0 %v1172
        %1192 = vmatprep.subr.mxu0 0.0
        %1193 = vmatpush1.msra.mxu0 %v1173
        %1194 = vmatprep.subr.mxu0 0.0
        %1195 = vmatpush1.msra.mxu0 0.0
        %1196 = vmatprep.subr.mxu0 0.0
        %1197 = vmatpush1.msra.mxu0 0.0
        %1198 = vmatprep.subr.mxu0 0.0
        %1199 = vmatpush1.msra.mxu0 0.0
        %1200 = vmatprep.subr.mxu0 0.0
        %1201 = vmatpush1.msra.mxu0 0.0
        %1202 = vmatprep.subr.mxu0 0.0
        %1203 = vmatpush1.msra.mxu0 0.0
        %1204 = vmatprep.subr.mxu0 0.0
        %1205 = vmatpush1.msra.mxu0 0.0
        %1206 = vmatprep.subr.mxu0 0.0
        %1207 = vmatpush1.msra.mxu0 0.0
        %1208 = vmatprep.subr.mxu0 0.0
        %1209 = vmatpush1.msra.mxu0 0.0
        %1210 = vmatprep.subr.mxu0 0.0
        %1211 = vmatpush1.msra.mxu0 0.0
        %1212 = vmatprep.subr.mxu0 0.0
        %1213 = vmatpush1.msra.mxu0 0.0
        %1214 = vmatprep.subr.mxu0 0.0
        %1215 = vmatpush1.msra.mxu0 0.0
        %1216 = vmatprep.subr.mxu0 0.0
        %1217 = vmatpush1.msra.mxu0 0.0
        %1218 = vmatprep.subr.mxu0 0.0
        %1219 = vmatpush1.msra.mxu0 0.0
        %1220 = vmatprep.subr.mxu0 0.0
        %1221 = vmatpush1.msra.mxu0 0.0
        %1222 = vmatprep.subr.mxu0 0.0
        %1223 = vmatpush1.msra.mxu0 0.0
        %1224 = vmatprep.subr.mxu0 0.0
        %1225 = vmatpush1.msra.mxu0 0.0
        %1226 = vmatprep.subr.mxu0 0.0
        %1227 = vmatpush1.msra.mxu0 0.0
        %1228 = vmatprep.subr.mxu0 0.0
        %1229 = vmatpush1.msra.mxu0 0.0
        %1230 = vmatprep.subr.mxu0 0.0
        %1231 = vmatpush1.msra.mxu0 0.0
        %1232 = vmatprep.subr.mxu0 0.0
        %1233 = vmatpush1.msra.mxu0 0.0
        %1234 = vmatprep.subr.mxu0 0.0
        %1235 = vmatpush1.msra.mxu0 0.0
        %1236 = vmatprep.subr.mxu0 0.0
        %1237 = vmatpush1.msra.mxu0 0.0
        %1238 = vmatprep.subr.mxu0 0.0
        %1239 = vmatpush1.msra.mxu0 0.0
        %1240 = vmatprep.subr.mxu0 0.0
        %1241 = vmatpush1.msra.mxu0 0.0
        %1242 = vmatprep.mubr.f32.mxu0 0.0
        %1243 = vmatmul.mubr.f32.gmra.mrb[0].mxu0 %v1176
        %v1244 = vpop.f32.mrb[0].mxu0
        %v1245 = vadd.f32 0.0, %v1244
        %v1246 = vpop.f32.mrb[0].mxu0
        %1247 = vdwg.mxu0
        %v1248 = vld [vmem:[%s6] sm:$0xff]
        %v1249 = vld [vmem:[%s6 + $0x8] sm:$0xff]
        %v1250 = vld [vmem:[%s6 + $0x10] sm:$0xff]
        %v1251 = vld [vmem:[%s6 + $0x18] sm:$0xff]
        %v1252 = vlaneseq
        %v1253 = vshrl.u32 %v1252, 7
        %v1254 = vsub.s32 3, %v1253
        %v1255 = vrot.slane %v485, %v1254
        %v1257 = vsel %vm496, %v1245, 0
        %1259 = vmatprep.subr.mxu0 0.0
        %1260 = vmatpush1.msra.mxu0 %v1248
        %1261 = vmatprep.subr.mxu0 0.0
        %1262 = vmatpush1.msra.mxu0 %v1249
        %1263 = vmatprep.subr.mxu0 0.0
        %1264 = vmatpush1.msra.mxu0 %v1250
        %1265 = vmatprep.subr.mxu0 0.0
        %1266 = vmatpush1.msra.mxu0 %v1251
        %1267 = vmatprep.subr.mxu0 0.0
        %1268 = vmatpush1.msra.mxu0 0.0
        %1269 = vmatprep.subr.mxu0 0.0
        %1270 = vmatpush1.msra.mxu0 0.0
        %1271 = vmatprep.subr.mxu0 0.0
        %1272 = vmatpush1.msra.mxu0 0.0
        %1273 = vmatprep.subr.mxu0 0.0
        %1274 = vmatpush1.msra.mxu0 0.0
        %1275 = vmatprep.subr.mxu0 0.0
        %1276 = vmatpush1.msra.mxu0 0.0
        %1277 = vmatprep.subr.mxu0 0.0
        %1278 = vmatpush1.msra.mxu0 0.0
        %1279 = vmatprep.subr.mxu0 0.0
        %1280 = vmatpush1.msra.mxu0 0.0
        %1281 = vmatprep.subr.mxu0 0.0
        %1282 = vmatpush1.msra.mxu0 0.0
        %1283 = vmatprep.subr.mxu0 0.0
        %1284 = vmatpush1.msra.mxu0 0.0
        %1285 = vmatprep.subr.mxu0 0.0
        %1286 = vmatpush1.msra.mxu0 0.0
        %1287 = vmatprep.subr.mxu0 0.0
        %1288 = vmatpush1.msra.mxu0 0.0
        %1289 = vmatprep.subr.mxu0 0.0
        %1290 = vmatpush1.msra.mxu0 0.0
        %1291 = vmatprep.subr.mxu0 0.0
        %1292 = vmatpush1.msra.mxu0 0.0
        %1293 = vmatprep.subr.mxu0 0.0
        %1294 = vmatpush1.msra.mxu0 0.0
        %1295 = vmatprep.subr.mxu0 0.0
        %1296 = vmatpush1.msra.mxu0 0.0
        %1297 = vmatprep.subr.mxu0 0.0
        %1298 = vmatpush1.msra.mxu0 0.0
        %1299 = vmatprep.subr.mxu0 0.0
        %1300 = vmatpush1.msra.mxu0 0.0
        %1301 = vmatprep.subr.mxu0 0.0
        %1302 = vmatpush1.msra.mxu0 0.0
        %1303 = vmatprep.subr.mxu0 0.0
        %1304 = vmatpush1.msra.mxu0 0.0
        %1305 = vmatprep.subr.mxu0 0.0
        %1306 = vmatpush1.msra.mxu0 0.0
        %1307 = vmatprep.subr.mxu0 0.0
        %1308 = vmatpush1.msra.mxu0 0.0
        %1309 = vmatprep.subr.mxu0 0.0
        %1310 = vmatpush1.msra.mxu0 0.0
        %1311 = vmatprep.subr.mxu0 0.0
        %1312 = vmatpush1.msra.mxu0 0.0
        %1313 = vmatprep.subr.mxu0 0.0
        %1314 = vmatpush1.msra.mxu0 0.0
        %1315 = vmatprep.subr.mxu0 0.0
        %1316 = vmatpush1.msra.mxu0 0.0
        %1317 = vmatprep.subr.mxu0 0.0
        %1318 = vmatpush1.msra.mxu0 0.0
        %1319 = vmatprep.subr.mxu0 0.0
        %1320 = vmatpush1.msra.mxu0 0.0
        %1321 = vmatprep.subr.mxu0 0.0
        %1322 = vmatpush1.msra.mxu0 0.0
        %1323 = vmatprep.mubr.f32.mxu0 0.0
        %1324 = vmatmul.mubr.f32.gmra.mrb[0].mxu0 %v1257
        %v1325 = vpop.f32.mrb[0].mxu0
        %v1326 = vadd.f32 %v1255, %v1325
        %v1327 = vpop.f32.mrb[0].mxu0
        %1328 = vdwg.mxu0
        %v1329 = vsel %vm496, %v1326, 0.0
        %1330 = vadd.xlane.f32.xlu0 %v1329
        %v1331 = vpop.xlane.xlu0 %1330
        %v1332 = vrcp.pop 32.0
        %v1333 = vmul.f32 %v1331, %v1332
        %v1334 = vsub.f32 %v1326, %v1333
        %v1335 = vmul.f32 %v1334, %v1334
        %v1336 = vsel %vm496, %v1335, 0.0
        %1337 = vadd.xlane.f32.xlu0 %v1336
        %v1338 = vpop.xlane.xlu0 %1337
        %v1339 = vmul.f32 %v1338, %v1332
        %v1340 = vadd.f32 %v1339, 1e-05
        %v1341 = vrsqrt.pop %v1340
        %v1342 = vmul.f32 %v1334, %v1341
        %v1343 = vlaneseq
        %v1344 = vshrl.u32 %v1343, 7
        %v1345 = vsub.s32 4, %v1344
        %v1346 = vrot.slane %v485, %v1345
        %v1347 = vmul.f32 %v1342, %v1346
        %v1348 = vlaneseq
        %v1349 = vshrl.u32 %v1348, 7
        %v1350 = vsub.s32 5, %v1349
        %v1351 = vrot.slane %v485, %v1350
        %v1352 = vadd.f32 %v1347, %v1351
        %v1353 = vld [vmem:[#allocation2] sm:$0xff]
        %v1354 = vld [vmem:[#allocation2 + $0x8] sm:$0xff]
        %v1355 = vld [vmem:[#allocation2 + $0x10] sm:$0xff]
        %v1356 = vld [vmem:[#allocation2 + $0x18] sm:$0xff]
        %v1357 = vlaneseq
        %v1358 = vshrl.u32 %v1357, 7
        %v1359 = vsub.s32 6, %v1358
        %v1360 = vrot.slane %v485, %v1359
        %v1362 = vsel %vm496, %v1352, 0
        %1364 = vmatprep.subr.mxu0 0.0
        %1365 = vmatpush1.msra.mxu0 %v1353
        %1366 = vmatprep.subr.mxu0 0.0
        %1367 = vmatpush1.msra.mxu0 %v1354
        %1368 = vmatprep.subr.mxu0 0.0
        %1369 = vmatpush1.msra.mxu0 %v1355
        %1370 = vmatprep.subr.mxu0 0.0
        %1371 = vmatpush1.msra.mxu0 %v1356
        %1372 = vmatprep.subr.mxu0 0.0
        %1373 = vmatpush1.msra.mxu0 0.0
        %1374 = vmatprep.subr.mxu0 0.0
        %1375 = vmatpush1.msra.mxu0 0.0
        %1376 = vmatprep.subr.mxu0 0.0
        %1377 = vmatpush1.msra.mxu0 0.0
        %1378 = vmatprep.subr.mxu0 0.0
        %1379 = vmatpush1.msra.mxu0 0.0
        %1380 = vmatprep.subr.mxu0 0.0
        %1381 = vmatpush1.msra.mxu0 0.0
        %1382 = vmatprep.subr.mxu0 0.0
        %1383 = vmatpush1.msra.mxu0 0.0
        %1384 = vmatprep.subr.mxu0 0.0
        %1385 = vmatpush1.msra.mxu0 0.0
        %1386 = vmatprep.subr.mxu0 0.0
        %1387 = vmatpush1.msra.mxu0 0.0
        %1388 = vmatprep.subr.mxu0 0.0
        %1389 = vmatpush1.msra.mxu0 0.0
        %1390 = vmatprep.subr.mxu0 0.0
        %1391 = vmatpush1.msra.mxu0 0.0
        %1392 = vmatprep.subr.mxu0 0.0
        %1393 = vmatpush1.msra.mxu0 0.0
        %1394 = vmatprep.subr.mxu0 0.0
        %1395 = vmatpush1.msra.mxu0 0.0
        %1396 = vmatprep.subr.mxu0 0.0
        %1397 = vmatpush1.msra.mxu0 0.0
        %1398 = vmatprep.subr.mxu0 0.0
        %1399 = vmatpush1.msra.mxu0 0.0
        %1400 = vmatprep.subr.mxu0 0.0
        %1401 = vmatpush1.msra.mxu0 0.0
        %1402 = vmatprep.subr.mxu0 0.0
        %1403 = vmatpush1.msra.mxu0 0.0
        %1404 = vmatprep.subr.mxu0 0.0
        %1405 = vmatpush1.msra.mxu0 0.0
        %1406 = vmatprep.subr.mxu0 0.0
        %1407 = vmatpush1.msra.mxu0 0.0
        %1408 = vmatprep.subr.mxu0 0.0
        %1409 = vmatpush1.msra.mxu0 0.0
        %1410 = vmatprep.subr.mxu0 0.0
        %1411 = vmatpush1.msra.mxu0 0.0
        %1412 = vmatprep.subr.mxu0 0.0
        %1413 = vmatpush1.msra.mxu0 0.0
        %1414 = vmatprep.subr.mxu0 0.0
        %1415 = vmatpush1.msra.mxu0 0.0
        %1416 = vmatprep.subr.mxu0 0.0
        %1417 = vmatpush1.msra.mxu0 0.0
        %1418 = vmatprep.subr.mxu0 0.0
        %1419 = vmatpush1.msra.mxu0 0.0
        %1420 = vmatprep.subr.mxu0 0.0
        %1421 = vmatpush1.msra.mxu0 0.0
        %1422 = vmatprep.subr.mxu0 0.0
        %1423 = vmatpush1.msra.mxu0 0.0
        %1424 = vmatprep.subr.mxu0 0.0
        %1425 = vmatpush1.msra.mxu0 0.0
        %1426 = vmatprep.subr.mxu0 0.0
        %1427 = vmatpush1.msra.mxu0 0.0
        %1428 = vmatprep.mubr.f32.mxu0 0.0
        %1429 = vmatmul.mubr.f32.gmra.mrb[0].mxu0 %v1362
        %v1430 = vpop.f32.mrb[0].mxu0
        %v1431 = vadd.f32 %v1360, %v1430
        %v1432 = vpop.f32.mrb[0].mxu0
        %1433 = vdwg.mxu0
        %1434 = vadd.xlane.f32.xlu0 %v1431
        %v1435 = vpop.xlane.xlu0 %1434
        %v1436 = vmul.f32 %v1435, 0.015625
        %v1437 = vmul.f32 %v1431, %v1431
        %1438 = vadd.xlane.f32.xlu0 %v1437
        %v1439 = vpop.xlane.xlu0 %1438
        %v1440 = vmul.f32 %v1439, 0.015625
        %v1441 = vmul.f32 %v1436, %v1436
        %v1442 = vsub.f32 %v1440, %v1441
        %v1443 = vsub.f32 %v1431, %v1436
        %v1444 = vadd.f32 %v1442, 1e-05
        %v1445 = vrsqrt.pop %v1444
        %v1446 = vmul.f32 %v1443, %v1445
        %v1447 = vlaneseq
        %v1448 = vshrl.u32 %v1447, 7
        %v1449 = vsub.s32 7, %v1448
        %v1450 = vrot.slane %v485, %v1449
        %v1451 = vmul.f32 %v1446, %v1450
        %v1452 = vlaneseq
        %v1453 = vshrl.u32 %v1452, 7
        %v1454 = vsub.s32 0, %v1453
        %v1455 = vrot.slane %v486, %v1454
        %v1456 = vadd.f32 %v1451, %v1455
        %1457 = vst [vmem:[%s484] sm:$0xff] %v1456
        %p1458 = scmp.lt.s32.totalorder %s25, 1
        %s1459 = scalar_select %p1458, %s25, 1
        %s1460 = smul.addr %s1459, 8
        %s1461 = scalar_lea.vmem %s12, %s1460
        // Predicated region
        $region81: #{transformer_block.1} parent=67 // pred_check
          %p1462 = pneg %p310
        $region82: #{transformer_block.1} parent=67 // pred_check_branch
          %1464 = sbr.rel (%p1462) target = $region84
        $region83: #{transformer_block.1} parent=67 // pred_region
          _
        $region84: #{transformer_block.1} parent=67 // pred_fallthru
          _
      $region68: #{transformer_block.1} parent=5 // pred_fallthru
        _
      %p1465 = scmp.le.s32.totalorder 2, %s20
      // Predicated region
      $region85: #{transformer_block.1} parent=5 // pred_check
        %p1466 = pneg %p1465
      $region86: #{transformer_block.1} parent=5 // pred_check_branch
        %1468 = sbr.rel (%p1466) target = $region88
      $region87: #{transformer_block.1} parent=5 // pred_region
        %s1469 = ssub.s32 %s20, 2
        // Predicated region
        $region89: #{transformer_block.1} parent=87 // pred_check
          %p1470 = pneg %p316
        $region90: #{transformer_block.1} parent=87 // pred_check_branch
          %1472 = sbr.rel (%p1470) target = $region92
        $region91: #{transformer_block.1} parent=87 // pred_region
          %p1473 = scmp.lt.s32.totalorder %s26, 1
          %s1474 = scalar_select %p1473, %s26, 1
          %s1475 = smul.addr %s1474, 8
          %s1476 = scalar_lea.vmem %s12, %s1475
        $region92: #{transformer_block.1} parent=87 // pred_fallthru
          _
      $region88: #{transformer_block.1} parent=5 // pred_fallthru
        _
    $region6: #{transformer_block.1} parent=1 // loop_footer
      %s24 = sadd.s32 1, %s20
    $region7: #{transformer_block.1} parent=1 // loop_footer_branch
      %19 = sbr.rel target = $region3
    $region8: #{transformer_block.1} parent=1 // loop_exit
      _
    %1477 = vsyncpa [#allocation3], 1
    %s1478 = scalar_lea.sflag [#allocation3], 1
    %1479 = vsyncpa %s1478, 1
    %1480 = vsyncpa [#allocation5], 1

</llo_original>
